<compile_context>
chip_gen: v5e
topology: v5e:2x2
jax: 0.10.0
libtpu: 0.0.40
codegen_flags: <defaults>
</compile_context>

<pallas_src>
import functools

import jax
import jax.numpy as jnp
from jax import lax
from jax.experimental import pallas as pl
from jax.experimental.pallas import tpu as pltpu


# ----------------------------------------------------------------------------
# Fused kernel: embedding gather + stacked LSTM layers, single grid step.
# ----------------------------------------------------------------------------
def _fused_rnn_lm_kernel(*refs, num_layers, seq_len, batch, hidden_sizes):
    """Fused forward for the whole RNNLanguageModel.

    refs layout (built by fused_rnn_lm_forward):
      [0]                       ids_ref   SMEM (T, B) int32   (scalar prefetch)
      [1]                       emb_ref   VMEM (V, 1, D) f32
      [2+2l], [3+2l]            w_l (in_l+H_l, 4H_l) bf16 ; b_l (1, 4H_l) f32
      [2+2L+2l], [2+2L+2l+1]    h0_l, c0_l  (B, H_l) f32
      outputs:
      [2+4L]                    y_ref (T, B, H_last) f32
      [2+4L+1+2l], [+1]         hn_l, cn_l  (B, H_l) f32
    """
    L = num_layers
    ids_ref, emb_ref = refs[0], refs[1]
    w_refs = [refs[2 + 2 * l] for l in range(L)]
    b_refs = [refs[3 + 2 * l] for l in range(L)]
    sbase = 2 + 2 * L
    h0_refs = [refs[sbase + 2 * l] for l in range(L)]
    c0_refs = [refs[sbase + 2 * l + 1] for l in range(L)]
    obase = sbase + 2 * L
    y_ref = refs[obase]
    hn_refs = [refs[obase + 1 + 2 * l] for l in range(L)]
    cn_refs = [refs[obase + 2 + 2 * l] for l in range(L)]

    # Hoisted out of the time loop: weight loads (already bf16) and bias
    # broadcasts (JAX does not CSE broadcast_in_dim inside loops).
    ws = [w_refs[l][...] for l in range(L)]
    bs = [jnp.broadcast_to(b_refs[l][...], (batch, 4 * hidden_sizes[l]))
          for l in range(L)]

    h = [h0_refs[l][...] for l in range(L)]   # f32 (B, H_l)
    c = [c0_refs[l][...] for l in range(L)]

    def lstm_cell(x, h_prev, c_prev, w, b, H):
        # One fused MXU dot: [x, h] @ [W_ih^T ; W_hh^T], bf16 in, f32 accumulate.
        xh = jnp.concatenate([x, h_prev], axis=1).astype(jnp.bfloat16)
        gates = jnp.dot(xh, w, preferred_element_type=jnp.float32) + b
        # NOTE: 32-lane gate slices inside one 128-lane vreg cost a little
        # cross-lane work; acceptable at H=32 (perf review calls it minor).
        i_g = jax.nn.sigmoid(gates[:, 0 * H:1 * H])
        f_g = jax.nn.sigmoid(gates[:, 1 * H:2 * H])
        g_g = jnp.tanh(gates[:, 2 * H:3 * H])
        o_g = jax.nn.sigmoid(gates[:, 3 * H:4 * H])
        c_new = f_g * c_prev + i_g * g_g
        h_new = o_g * jnp.tanh(c_new)
        return h_new, c_new

    # Fully-unrolled time loop (T small & static): equivalent to
    # lax.fori_loop(0, T, ..., unroll=True) but keeps every ref index static.
    for t in range(seq_len):
        # Embedding gather: dynamic row reads of the VMEM-resident table,
        # indexed by SMEM-prefetched token ids.
        rows = [emb_ref[ids_ref[t, bb]] for bb in range(batch)]   # each (1, D)
        x = jnp.concatenate(rows, axis=0)                         # (B, D) f32
        for l in range(L):
            h[l], c[l] = lstm_cell(x, h[l], c[l], ws[l], bs[l], hidden_sizes[l])
            x = h[l]
        y_ref[t] = x.astype(y_ref.dtype)   # store into VMEM-resident out block

    for l in range(L):
        hn_refs[l][...] = h[l].astype(hn_refs[l].dtype)
        cn_refs[l][...] = c[l].astype(cn_refs[l].dtype)


def fused_rnn_lm_forward(token_ids, emb3, fused_ws, fused_bs, h0s, c0s):
    """token_ids (T,B) int32; emb3 (V,1,D) f32; per-layer fused W (in+H,4H) bf16,
    bias (1,4H) f32, h0/c0 (B,H) f32. Returns y (T,B,H), [h_n], [c_n]."""
    T, B = token_ids.shape
    L = len(fused_ws)
    hidden_sizes = tuple(int(w.shape[1]) // 4 for w in fused_ws)
    H_last = hidden_sizes[-1]

    kernel = functools.partial(
        _fused_rnn_lm_kernel, num_layers=L, seq_len=T, batch=B,
        hidden_sizes=hidden_sizes)

    def full_spec(shape):
        nd = len(shape)
        # index_map receives (grid idx, scalar-prefetch ref); block = whole array
        return pl.BlockSpec(shape, lambda i, ids, _nd=nd: (0,) * _nd)

    in_specs = [full_spec(emb3.shape)]
    for w, b in zip(fused_ws, fused_bs):
        in_specs += [full_spec(w.shape), full_spec(b.shape)]
    for h0, c0 in zip(h0s, c0s):
        in_specs += [full_spec(h0.shape), full_spec(c0.shape)]

    out_shape = [jax.ShapeDtypeStruct((T, B, H_last), jnp.float32)]
    out_specs = [full_spec((T, B, H_last))]
    for Hl in hidden_sizes:
        out_shape += [jax.ShapeDtypeStruct((B, Hl), jnp.float32)] * 2
        out_specs += [full_spec((B, Hl)), full_spec((B, Hl))]

    operands = [emb3]
    for w, b in zip(fused_ws, fused_bs):
        operands += [w, b]
    for h0, c0 in zip(h0s, c0s):
        operands += [h0, c0]

    outs = pl.pallas_call(
        kernel,
        out_shape=tuple(out_shape),
        grid_spec=pltpu.PrefetchScalarGridSpec(
            num_scalar_prefetch=1,          # token ids -> SMEM
            grid=(1,),                      # single step: no per-step overhead
            in_specs=in_specs,
            out_specs=tuple(out_specs),
        ),
        compiler_params=pltpu.CompilerParams(
            dimension_semantics=("arbitrary",)),
    )(token_ids, *operands)

    y = outs[0]
    hs = [outs[1 + 2 * l] for l in range(L)]
    cs = [outs[2 + 2 * l] for l in range(L)]
    return y, hs, cs


# ----------------------------------------------------------------------------
# Model wrapper (mirrors RNNLanguageModel.forward / init_hidden_layer)
# ----------------------------------------------------------------------------
class RNNLanguageModelPallas:
    def __init__(self, key, *, vocab_size, input_size, hidden_size, num_layers):
        self.num_layers = num_layers
        keys = jax.random.split(key, 1 + 4 * num_layers)
        # encoder = embedding table (vocab, input_size)
        self.embedding = jax.random.normal(
            keys[0], (vocab_size, input_size), jnp.float32) * 0.1
        self.layers = []
        k_idx = 1
        for layer in range(num_layers):
            in_sz = input_size if layer == 0 else hidden_size
            h_sz = hidden_size   # weight_tying=False -> last layer hidden_size
            bound = 1.0 / jnp.sqrt(h_sz)
            w_ih = jax.random.uniform(keys[k_idx], (4 * h_sz, in_sz),
                                      jnp.float32, -bound, bound)
            w_hh = jax.random.uniform(keys[k_idx + 1], (4 * h_sz, h_sz),
                                      jnp.float32, -bound, bound)
            b_ih = jax.random.uniform(keys[k_idx + 2], (4 * h_sz,),
                                      jnp.float32, -bound, bound)
            b_hh = jax.random.uniform(keys[k_idx + 3], (4 * h_sz,),
                                      jnp.float32, -bound, bound)
            k_idx += 4
            self.layers.append((w_ih, w_hh, b_ih, b_hh))

        # Pre-fused / pre-cast kernel parameters (hoisted out of the call path):
        #   W = [W_ih^T ; W_hh^T] in bf16 (MXU-native), bias = b_ih + b_hh (f32).
        self.fused_w, self.fused_b = [], []
        for (w_ih, w_hh, b_ih, b_hh) in self.layers:
            self.fused_w.append(
                jnp.concatenate([w_ih.T, w_hh.T], axis=0).astype(jnp.bfloat16))
            self.fused_b.append(
                (b_ih + b_hh).reshape(1, -1).astype(jnp.float32))
        # Embedding reshaped so the vocab axis is a leading (untiled) axis
        # -> cheap dynamic row gather inside the kernel.
        self.emb3 = self.embedding.reshape(vocab_size, 1, input_size)

    def init_hidden_layer(self, key, batch_size):
        hidden = []
        for layer_idx, (_, w_hh, _, _) in enumerate(self.layers):
            h_sz = w_hh.shape[1]
            k1, k2 = jax.random.split(jax.random.fold_in(key, layer_idx))
            h = jax.random.normal(k1, (1, batch_size, h_sz), jnp.float32)
            c = jax.random.normal(k2, (1, batch_size, h_sz), jnp.float32)
            hidden.append((h, c))
        return tuple(hidden)

    def forward(self, X, hidden):
        # X: (T, B) int32 token ids; hidden: tuple of ((1,B,H),(1,B,H)) per layer
        h0s = [h[0] for (h, _) in hidden]
        c0s = [c[0] for (_, c) in hidden]
        y, hs, cs = fused_rnn_lm_forward(
            X, self.emb3, self.fused_w, self.fused_b, h0s, c0s)
        hidden_n = [(h[None], c[None]) for h, c in zip(hs, cs)]
        return y, hidden_n

    # Pure-JAX reference. matmul_dtype=jnp.bfloat16 matches the kernel's MXU
    # operand precision exactly; jnp.float32 gives the full-precision spec.
    def reference_forward(self, X, hidden, matmul_dtype=jnp.float32):
        x = jnp.take(self.embedding, X, axis=0)      # (T, B, D)
        hidden_n = []
        for (w_ih, w_hh, b_ih, b_hh), (h0, c0) in zip(self.layers, hidden):
            H = w_hh.shape[1]
            w = jnp.concatenate([w_ih.T, w_hh.T], axis=0).astype(matmul_dtype)
            b = (b_ih + b_hh)[None, :]

            def step(carry, x_t, w=w, b=b, H=H):
                h, c = carry
                xh = jnp.concatenate([x_t, h], axis=1).astype(matmul_dtype)
                gates = jnp.dot(xh, w, preferred_element_type=jnp.float32) + b
                i = jax.nn.sigmoid(gates[:, 0 * H:1 * H])
                f = jax.nn.sigmoid(gates[:, 1 * H:2 * H])
                g = jnp.tanh(gates[:, 2 * H:3 * H])
                o = jax.nn.sigmoid(gates[:, 3 * H:4 * H])
                c = f * c + i * g
                h = o * jnp.tanh(c)
                return (h, c), h

            (h_n, c_n), ys = lax.scan(step, (h0[0], c0[0]), x)
            x = ys
            hidden_n.append((h_n[None], c_n[None]))
        return x, hidden_n


if __name__ == "__main__":
    SEQ, BATCH = 8, 2
    VOCAB, INPUT, HIDDEN, LAYERS = 20, 32, 32, 2

    key = jax.random.PRNGKey(0)
    k_model, k_hidden, k_x = jax.random.split(key, 3)

    model = RNNLanguageModelPallas(k_model, vocab_size=VOCAB, input_size=INPUT,
                                   hidden_size=HIDDEN, num_layers=LAYERS)
    hidden0 = model.init_hidden_layer(k_hidden, BATCH)
    X = jax.random.randint(k_x, (SEQ, BATCH), 0, VOCAB, dtype=jnp.int32)

    out, hidden_n = model.forward(X, hidden0)
    out = jax.block_until_ready(out)
    assert out.shape == (SEQ, BATCH, HIDDEN)

    # Tight check vs a reference using the same bf16 MXU operands / f32 accum.
    out_bf, hid_bf = model.reference_forward(X, hidden0, matmul_dtype=jnp.bfloat16)
    assert jnp.allclose(out, out_bf, atol=1e-3, rtol=1e-3), \
        float(jnp.max(jnp.abs(out - out_bf)))
    for (h_p, c_p), (h_r, c_r) in zip(hidden_n, hid_bf):
        assert jnp.allclose(h_p, h_r, atol=1e-3, rtol=1e-3)
        assert jnp.allclose(c_p, c_r, atol=1e-3, rtol=1e-3)

    # Loose sanity check vs the full-fp32 reference (bf16 MXU inputs are the
    # only deliberate deviation, as acknowledged in the perf review).
    out_fp, hid_fp = model.reference_forward(X, hidden0, matmul_dtype=jnp.float32)
    assert jnp.allclose(out, out_fp, atol=5e-2, rtol=5e-2), \
        float(jnp.max(jnp.abs(out - out_fp)))
    for (h_p, c_p), (h_r, c_r) in zip(hidden_n, hid_fp):
        assert jnp.allclose(h_p, h_r, atol=5e-2, rtol=5e-2)
        assert jnp.allclose(c_p, c_r, atol=5e-2, rtol=5e-2)

    print("KERNEL_OK")
</pallas_src>

<mosaic_0001>
module attributes {stable_mosaic.version = 11 : i64} {
  func.func @_fused_rnn_lm_kernel(%arg0: i32, %arg1: memref<8x2xi32, #tpu.memory_space<smem>>, %arg2: memref<20x1x32xf32, #tpu.memory_space<vmem>>, %arg3: memref<64x128xbf16, #tpu.memory_space<vmem>>, %arg4: memref<1x128xf32, #tpu.memory_space<vmem>>, %arg5: memref<64x128xbf16, #tpu.memory_space<vmem>>, %arg6: memref<1x128xf32, #tpu.memory_space<vmem>>, %arg7: memref<2x32xf32, #tpu.memory_space<vmem>>, %arg8: memref<2x32xf32, #tpu.memory_space<vmem>>, %arg9: memref<2x32xf32, #tpu.memory_space<vmem>>, %arg10: memref<2x32xf32, #tpu.memory_space<vmem>>, %arg11: memref<8x2x32xf32, #tpu.memory_space<vmem>>, %arg12: memref<2x32xf32, #tpu.memory_space<vmem>>, %arg13: memref<2x32xf32, #tpu.memory_space<vmem>>, %arg14: memref<2x32xf32, #tpu.memory_space<vmem>>, %arg15: memref<2x32xf32, #tpu.memory_space<vmem>>) attributes {dimension_semantics = [#tpu.dimension_semantics<arbitrary>], iteration_bounds = array<i64: 1>, scalar_prefetch = 1 : i64, scratch_operands = 0 : i64, tpu.core_type = #tpu.core_type<tc>, window_params = [{pipeline_mode = #tpu.pipeline_mode<synchronous>, transform_indices = @transform_0, window_bounds = array<i64: 20, 1, 32>}, {pipeline_mode = #tpu.pipeline_mode<synchronous>, transform_indices = @transform_1, window_bounds = array<i64: 64, 128>}, {pipeline_mode = #tpu.pipeline_mode<synchronous>, transform_indices = @transform_2, window_bounds = array<i64: 1, 128>}, {pipeline_mode = #tpu.pipeline_mode<synchronous>, transform_indices = @transform_3, window_bounds = array<i64: 64, 128>}, {pipeline_mode = #tpu.pipeline_mode<synchronous>, transform_indices = @transform_4, window_bounds = array<i64: 1, 128>}, {pipeline_mode = #tpu.pipeline_mode<synchronous>, transform_indices = @transform_5, window_bounds = array<i64: 2, 32>}, {pipeline_mode = #tpu.pipeline_mode<synchronous>, transform_indices = @transform_6, window_bounds = array<i64: 2, 32>}, {pipeline_mode = #tpu.pipeline_mode<synchronous>, transform_indices = @transform_7, window_bounds = array<i64: 2, 32>}, {pipeline_mode = #tpu.pipeline_mode<synchronous>, transform_indices = @transform_8, window_bounds = array<i64: 2, 32>}, {pipeline_mode = #tpu.pipeline_mode<synchronous>, transform_indices = @transform_9, window_bounds = array<i64: 8, 2, 32>}, {pipeline_mode = #tpu.pipeline_mode<synchronous>, transform_indices = @transform_10, window_bounds = array<i64: 2, 32>}, {pipeline_mode = #tpu.pipeline_mode<synchronous>, transform_indices = @transform_11, window_bounds = array<i64: 2, 32>}, {pipeline_mode = #tpu.pipeline_mode<synchronous>, transform_indices = @transform_12, window_bounds = array<i64: 2, 32>}, {pipeline_mode = #tpu.pipeline_mode<synchronous>, transform_indices = @transform_13, window_bounds = array<i64: 2, 32>}]} {
    %c0 = arith.constant 0 : index
    %c0_0 = arith.constant 0 : index
    %0 = vector.load %arg3[%c0, %c0_0] : memref<64x128xbf16, #tpu.memory_space<vmem>>, vector<64x128xbf16>
    %c0_1 = arith.constant 0 : index
    %c0_2 = arith.constant 0 : index
    %1 = vector.load %arg5[%c0_1, %c0_2] : memref<64x128xbf16, #tpu.memory_space<vmem>>, vector<64x128xbf16>
    %c0_3 = arith.constant 0 : index
    %c0_4 = arith.constant 0 : index
    %2 = vector.load %arg4[%c0_3, %c0_4] : memref<1x128xf32, #tpu.memory_space<vmem>>, vector<1x128xf32>
    %3 = vector.shape_cast %2 : vector<1x128xf32> to vector<1x128xf32>
    %4 = vector.broadcast %3 : vector<1x128xf32> to vector<2x128xf32>
    %c0_5 = arith.constant 0 : index
    %c0_6 = arith.constant 0 : index
    %5 = vector.load %arg6[%c0_5, %c0_6] : memref<1x128xf32, #tpu.memory_space<vmem>>, vector<1x128xf32>
    %6 = vector.shape_cast %5 : vector<1x128xf32> to vector<1x128xf32>
    %7 = vector.broadcast %6 : vector<1x128xf32> to vector<2x128xf32>
    %c0_7 = arith.constant 0 : index
    %c0_8 = arith.constant 0 : index
    %8 = vector.load %arg7[%c0_7, %c0_8] : memref<2x32xf32, #tpu.memory_space<vmem>>, vector<2x32xf32>
    %c0_9 = arith.constant 0 : index
    %c0_10 = arith.constant 0 : index
    %9 = vector.load %arg9[%c0_9, %c0_10] : memref<2x32xf32, #tpu.memory_space<vmem>>, vector<2x32xf32>
    %c0_11 = arith.constant 0 : index
    %c0_12 = arith.constant 0 : index
    %10 = vector.load %arg8[%c0_11, %c0_12] : memref<2x32xf32, #tpu.memory_space<vmem>>, vector<2x32xf32>
    %c0_13 = arith.constant 0 : index
    %c0_14 = arith.constant 0 : index
    %11 = vector.load %arg10[%c0_13, %c0_14] : memref<2x32xf32, #tpu.memory_space<vmem>>, vector<2x32xf32>
    %c0_15 = arith.constant 0 : index
    %c0_16 = arith.constant 0 : index
    %12 = memref.load %arg1[%c0_15, %c0_16] : memref<8x2xi32, #tpu.memory_space<smem>>
    %13 = arith.index_cast %12 : i32 to index
    %c0_17 = arith.constant 0 : index
    %c0_18 = arith.constant 0 : index
    %14 = vector.load %arg2[%13, %c0_17, %c0_18] : memref<20x1x32xf32, #tpu.memory_space<vmem>>, vector<1x1x32xf32>
    %15 = vector.shape_cast %14 : vector<1x1x32xf32> to vector<1x32xf32>
    %c0_19 = arith.constant 0 : index
    %c1 = arith.constant 1 : index
    %16 = memref.load %arg1[%c0_19, %c1] : memref<8x2xi32, #tpu.memory_space<smem>>
    %17 = arith.index_cast %16 : i32 to index
    %c0_20 = arith.constant 0 : index
    %c0_21 = arith.constant 0 : index
    %18 = vector.load %arg2[%17, %c0_20, %c0_21] : memref<20x1x32xf32, #tpu.memory_space<vmem>>, vector<1x1x32xf32>
    %19 = vector.shape_cast %18 : vector<1x1x32xf32> to vector<1x32xf32>
    %20 = tpu.concatenate %15, %19 in 0 : vector<1x32xf32>, vector<1x32xf32> -> vector<2x32xf32>
    %21 = tpu.concatenate %20, %8 in 1 : vector<2x32xf32>, vector<2x32xf32> -> vector<2x64xf32>
    %22 = arith.truncf %21 : vector<2x64xf32> to vector<2x64xbf16>
    %cst = arith.constant dense<0.000000e+00> : vector<2x128xf32>
    %23 = tpu.matmul %22, %0, %cst {dimension_numbers = #tpu.dot_dimension_numbers<[1], [0], [0], [1], [0, 0, 1, 1], [], []>} : vector<2x64xbf16>, vector<64x128xbf16>, vector<2x128xf32> -> vector<2x128xf32>
    %24 = arith.addf %23, %4 : vector<2x128xf32>
    %25 = vector.extract_strided_slice %24 {offsets = [0, 0], sizes = [2, 32], strides = [1, 1]} : vector<2x128xf32> to vector<2x32xf32>
    %26 = arith.negf %25 : vector<2x32xf32>
    %27 = math.exp %26 : vector<2x32xf32>
    %cst_22 = arith.constant 1.000000e+00 : f32
    %28 = vector.broadcast %cst_22 : f32 to vector<2x32xf32>
    %29 = arith.addf %28, %27 : vector<2x32xf32>
    %30 = arith.divf %28, %29 : vector<2x32xf32>
    %31 = vector.extract_strided_slice %24 {offsets = [0, 32], sizes = [2, 32], strides = [1, 1]} : vector<2x128xf32> to vector<2x32xf32>
    %32 = arith.negf %31 : vector<2x32xf32>
    %33 = math.exp %32 : vector<2x32xf32>
    %cst_23 = arith.constant 1.000000e+00 : f32
    %34 = vector.broadcast %cst_23 : f32 to vector<2x32xf32>
    %35 = arith.addf %34, %33 : vector<2x32xf32>
    %36 = arith.divf %34, %35 : vector<2x32xf32>
    %37 = vector.extract_strided_slice %24 {offsets = [0, 64], sizes = [2, 32], strides = [1, 1]} : vector<2x128xf32> to vector<2x32xf32>
    %38 = math.tanh %37 : vector<2x32xf32>
    %39 = vector.extract_strided_slice %24 {offsets = [0, 96], sizes = [2, 32], strides = [1, 1]} : vector<2x128xf32> to vector<2x32xf32>
    %40 = arith.negf %39 : vector<2x32xf32>
    %41 = math.exp %40 : vector<2x32xf32>
    %cst_24 = arith.constant 1.000000e+00 : f32
    %42 = vector.broadcast %cst_24 : f32 to vector<2x32xf32>
    %43 = arith.addf %42, %41 : vector<2x32xf32>
    %44 = arith.divf %42, %43 : vector<2x32xf32>
    %45 = arith.mulf %36, %10 : vector<2x32xf32>
    %46 = arith.mulf %30, %38 : vector<2x32xf32>
    %47 = arith.addf %45, %46 : vector<2x32xf32>
    %48 = math.tanh %47 : vector<2x32xf32>
    %49 = arith.mulf %44, %48 : vector<2x32xf32>
    %50 = tpu.concatenate %49, %9 in 1 : vector<2x32xf32>, vector<2x32xf32> -> vector<2x64xf32>
    %51 = arith.truncf %50 : vector<2x64xf32> to vector<2x64xbf16>
    %cst_25 = arith.constant dense<0.000000e+00> : vector<2x128xf32>
    %52 = tpu.matmul %51, %1, %cst_25 {dimension_numbers = #tpu.dot_dimension_numbers<[1], [0], [0], [1], [0, 0, 1, 1], [], []>} : vector<2x64xbf16>, vector<64x128xbf16>, vector<2x128xf32> -> vector<2x128xf32>
    %53 = arith.addf %52, %7 : vector<2x128xf32>
    %54 = vector.extract_strided_slice %53 {offsets = [0, 0], sizes = [2, 32], strides = [1, 1]} : vector<2x128xf32> to vector<2x32xf32>
    %55 = arith.negf %54 : vector<2x32xf32>
    %56 = math.exp %55 : vector<2x32xf32>
    %cst_26 = arith.constant 1.000000e+00 : f32
    %57 = vector.broadcast %cst_26 : f32 to vector<2x32xf32>
    %58 = arith.addf %57, %56 : vector<2x32xf32>
    %59 = arith.divf %57, %58 : vector<2x32xf32>
    %60 = vector.extract_strided_slice %53 {offsets = [0, 32], sizes = [2, 32], strides = [1, 1]} : vector<2x128xf32> to vector<2x32xf32>
    %61 = arith.negf %60 : vector<2x32xf32>
    %62 = math.exp %61 : vector<2x32xf32>
    %cst_27 = arith.constant 1.000000e+00 : f32
    %63 = vector.broadcast %cst_27 : f32 to vector<2x32xf32>
    %64 = arith.addf %63, %62 : vector<2x32xf32>
    %65 = arith.divf %63, %64 : vector<2x32xf32>
    %66 = vector.extract_strided_slice %53 {offsets = [0, 64], sizes = [2, 32], strides = [1, 1]} : vector<2x128xf32> to vector<2x32xf32>
    %67 = math.tanh %66 : vector<2x32xf32>
    %68 = vector.extract_strided_slice %53 {offsets = [0, 96], sizes = [2, 32], strides = [1, 1]} : vector<2x128xf32> to vector<2x32xf32>
    %69 = arith.negf %68 : vector<2x32xf32>
    %70 = math.exp %69 : vector<2x32xf32>
    %cst_28 = arith.constant 1.000000e+00 : f32
    %71 = vector.broadcast %cst_28 : f32 to vector<2x32xf32>
    %72 = arith.addf %71, %70 : vector<2x32xf32>
    %73 = arith.divf %71, %72 : vector<2x32xf32>
    %74 = arith.mulf %65, %11 : vector<2x32xf32>
    %75 = arith.mulf %59, %67 : vector<2x32xf32>
    %76 = arith.addf %74, %75 : vector<2x32xf32>
    %77 = math.tanh %76 : vector<2x32xf32>
    %78 = arith.mulf %73, %77 : vector<2x32xf32>
    %c0_29 = arith.constant 0 : index
    %c0_30 = arith.constant 0 : index
    %c0_31 = arith.constant 0 : index
    %79 = vector.load %arg11[%c0_29, %c0_30, %c0_31] : memref<8x2x32xf32, #tpu.memory_space<vmem>>, vector<1x2x32xf32>
    %80 = vector.shape_cast %79 : vector<1x2x32xf32> to vector<2x32xf32>
    %81 = vector.shape_cast %78 : vector<2x32xf32> to vector<1x2x32xf32>
    tpu.vector_store %arg11[%c0_29, %c0_30, %c0_31], %81 {strides = array<i32>} : memref<8x2x32xf32, #tpu.memory_space<vmem>>, vector<1x2x32xf32>,
    %c1_32 = arith.constant 1 : index
    %c0_33 = arith.constant 0 : index
    %82 = memref.load %arg1[%c1_32, %c0_33] : memref<8x2xi32, #tpu.memory_space<smem>>
    %83 = arith.index_cast %82 : i32 to index
    %c0_34 = arith.constant 0 : index
    %c0_35 = arith.constant 0 : index
    %84 = vector.load %arg2[%83, %c0_34, %c0_35] : memref<20x1x32xf32, #tpu.memory_space<vmem>>, vector<1x1x32xf32>
    %85 = vector.shape_cast %84 : vector<1x1x32xf32> to vector<1x32xf32>
    %c1_36 = arith.constant 1 : index
    %c1_37 = arith.constant 1 : index
    %86 = memref.load %arg1[%c1_36, %c1_37] : memref<8x2xi32, #tpu.memory_space<smem>>
    %87 = arith.index_cast %86 : i32 to index
    %c0_38 = arith.constant 0 : index
    %c0_39 = arith.constant 0 : index
    %88 = vector.load %arg2[%87, %c0_38, %c0_39] : memref<20x1x32xf32, #tpu.memory_space<vmem>>, vector<1x1x32xf32>
    %89 = vector.shape_cast %88 : vector<1x1x32xf32> to vector<1x32xf32>
    %90 = tpu.concatenate %85, %89 in 0 : vector<1x32xf32>, vector<1x32xf32> -> vector<2x32xf32>
    %91 = tpu.concatenate %90, %49 in 1 : vector<2x32xf32>, vector<2x32xf32> -> vector<2x64xf32>
    %92 = arith.truncf %91 : vector<2x64xf32> to vector<2x64xbf16>
    %cst_40 = arith.constant dense<0.000000e+00> : vector<2x128xf32>
    %93 = tpu.matmul %92, %0, %cst_40 {dimension_numbers = #tpu.dot_dimension_numbers<[1], [0], [0], [1], [0, 0, 1, 1], [], []>} : vector<2x64xbf16>, vector<64x128xbf16>, vector<2x128xf32> -> vector<2x128xf32>
    %94 = arith.addf %93, %4 : vector<2x128xf32>
    %95 = vector.extract_strided_slice %94 {offsets = [0, 0], sizes = [2, 32], strides = [1, 1]} : vector<2x128xf32> to vector<2x32xf32>
    %96 = arith.negf %95 : vector<2x32xf32>
    %97 = math.exp %96 : vector<2x32xf32>
    %cst_41 = arith.constant 1.000000e+00 : f32
    %98 = vector.broadcast %cst_41 : f32 to vector<2x32xf32>
    %99 = arith.addf %98, %97 : vector<2x32xf32>
    %100 = arith.divf %98, %99 : vector<2x32xf32>
    %101 = vector.extract_strided_slice %94 {offsets = [0, 32], sizes = [2, 32], strides = [1, 1]} : vector<2x128xf32> to vector<2x32xf32>
    %102 = arith.negf %101 : vector<2x32xf32>
    %103 = math.exp %102 : vector<2x32xf32>
    %cst_42 = arith.constant 1.000000e+00 : f32
    %104 = vector.broadcast %cst_42 : f32 to vector<2x32xf32>
    %105 = arith.addf %104, %103 : vector<2x32xf32>
    %106 = arith.divf %104, %105 : vector<2x32xf32>
    %107 = vector.extract_strided_slice %94 {offsets = [0, 64], sizes = [2, 32], strides = [1, 1]} : vector<2x128xf32> to vector<2x32xf32>
    %108 = math.tanh %107 : vector<2x32xf32>
    %109 = vector.extract_strided_slice %94 {offsets = [0, 96], sizes = [2, 32], strides = [1, 1]} : vector<2x128xf32> to vector<2x32xf32>
    %110 = arith.negf %109 : vector<2x32xf32>
    %111 = math.exp %110 : vector<2x32xf32>
    %cst_43 = arith.constant 1.000000e+00 : f32
    %112 = vector.broadcast %cst_43 : f32 to vector<2x32xf32>
    %113 = arith.addf %112, %111 : vector<2x32xf32>
    %114 = arith.divf %112, %113 : vector<2x32xf32>
    %115 = arith.mulf %106, %47 : vector<2x32xf32>
    %116 = arith.mulf %100, %108 : vector<2x32xf32>
    %117 = arith.addf %115, %116 : vector<2x32xf32>
    %118 = math.tanh %117 : vector<2x32xf32>
    %119 = arith.mulf %114, %118 : vector<2x32xf32>
    %120 = tpu.concatenate %119, %78 in 1 : vector<2x32xf32>, vector<2x32xf32> -> vector<2x64xf32>
    %121 = arith.truncf %120 : vector<2x64xf32> to vector<2x64xbf16>
    %cst_44 = arith.constant dense<0.000000e+00> : vector<2x128xf32>
    %122 = tpu.matmul %121, %1, %cst_44 {dimension_numbers = #tpu.dot_dimension_numbers<[1], [0], [0], [1], [0, 0, 1, 1], [], []>} : vector<2x64xbf16>, vector<64x128xbf16>, vector<2x128xf32> -> vector<2x128xf32>
    %123 = arith.addf %122, %7 : vector<2x128xf32>
    %124 = vector.extract_strided_slice %123 {offsets = [0, 0], sizes = [2, 32], strides = [1, 1]} : vector<2x128xf32> to vector<2x32xf32>
    %125 = arith.negf %124 : vector<2x32xf32>
    %126 = math.exp %125 : vector<2x32xf32>
    %cst_45 = arith.constant 1.000000e+00 : f32
    %127 = vector.broadcast %cst_45 : f32 to vector<2x32xf32>
    %128 = arith.addf %127, %126 : vector<2x32xf32>
    %129 = arith.divf %127, %128 : vector<2x32xf32>
    %130 = vector.extract_strided_slice %123 {offsets = [0, 32], sizes = [2, 32], strides = [1, 1]} : vector<2x128xf32> to vector<2x32xf32>
    %131 = arith.negf %130 : vector<2x32xf32>
    %132 = math.exp %131 : vector<2x32xf32>
    %cst_46 = arith.constant 1.000000e+00 : f32
    %133 = vector.broadcast %cst_46 : f32 to vector<2x32xf32>
    %134 = arith.addf %133, %132 : vector<2x32xf32>
    %135 = arith.divf %133, %134 : vector<2x32xf32>
    %136 = vector.extract_strided_slice %123 {offsets = [0, 64], sizes = [2, 32], strides = [1, 1]} : vector<2x128xf32> to vector<2x32xf32>
    %137 = math.tanh %136 : vector<2x32xf32>
    %138 = vector.extract_strided_slice %123 {offsets = [0, 96], sizes = [2, 32], strides = [1, 1]} : vector<2x128xf32> to vector<2x32xf32>
    %139 = arith.negf %138 : vector<2x32xf32>
    %140 = math.exp %139 : vector<2x32xf32>
    %cst_47 = arith.constant 1.000000e+00 : f32
    %141 = vector.broadcast %cst_47 : f32 to vector<2x32xf32>
    %142 = arith.addf %141, %140 : vector<2x32xf32>
    %143 = arith.divf %141, %142 : vector<2x32xf32>
    %144 = arith.mulf %135, %76 : vector<2x32xf32>
    %145 = arith.mulf %129, %137 : vector<2x32xf32>
    %146 = arith.addf %144, %145 : vector<2x32xf32>
    %147 = math.tanh %146 : vector<2x32xf32>
    %148 = arith.mulf %143, %147 : vector<2x32xf32>
    %c1_48 = arith.constant 1 : index
    %c0_49 = arith.constant 0 : index
    %c0_50 = arith.constant 0 : index
    %149 = vector.load %arg11[%c1_48, %c0_49, %c0_50] : memref<8x2x32xf32, #tpu.memory_space<vmem>>, vector<1x2x32xf32>
    %150 = vector.shape_cast %149 : vector<1x2x32xf32> to vector<2x32xf32>
    %151 = vector.shape_cast %148 : vector<2x32xf32> to vector<1x2x32xf32>
    tpu.vector_store %arg11[%c1_48, %c0_49, %c0_50], %151 {strides = array<i32>} : memref<8x2x32xf32, #tpu.memory_space<vmem>>, vector<1x2x32xf32>,
    %c2 = arith.constant 2 : index
    %c0_51 = arith.constant 0 : index
    %152 = memref.load %arg1[%c2, %c0_51] : memref<8x2xi32, #tpu.memory_space<smem>>
    %153 = arith.index_cast %152 : i32 to index
    %c0_52 = arith.constant 0 : index
    %c0_53 = arith.constant 0 : index
    %154 = vector.load %arg2[%153, %c0_52, %c0_53] : memref<20x1x32xf32, #tpu.memory_space<vmem>>, vector<1x1x32xf32>
    %155 = vector.shape_cast %154 : vector<1x1x32xf32> to vector<1x32xf32>
    %c2_54 = arith.constant 2 : index
    %c1_55 = arith.constant 1 : index
    %156 = memref.load %arg1[%c2_54, %c1_55] : memref<8x2xi32, #tpu.memory_space<smem>>
    %157 = arith.index_cast %156 : i32 to index
    %c0_56 = arith.constant 0 : index
    %c0_57 = arith.constant 0 : index
    %158 = vector.load %arg2[%157, %c0_56, %c0_57] : memref<20x1x32xf32, #tpu.memory_space<vmem>>, vector<1x1x32xf32>
    %159 = vector.shape_cast %158 : vector<1x1x32xf32> to vector<1x32xf32>
    %160 = tpu.concatenate %155, %159 in 0 : vector<1x32xf32>, vector<1x32xf32> -> vector<2x32xf32>
    %161 = tpu.concatenate %160, %119 in 1 : vector<2x32xf32>, vector<2x32xf32> -> vector<2x64xf32>
    %162 = arith.truncf %161 : vector<2x64xf32> to vector<2x64xbf16>
    %cst_58 = arith.constant dense<0.000000e+00> : vector<2x128xf32>
    %163 = tpu.matmul %162, %0, %cst_58 {dimension_numbers = #tpu.dot_dimension_numbers<[1], [0], [0], [1], [0, 0, 1, 1], [], []>} : vector<2x64xbf16>, vector<64x128xbf16>, vector<2x128xf32> -> vector<2x128xf32>
    %164 = arith.addf %163, %4 : vector<2x128xf32>
    %165 = vector.extract_strided_slice %164 {offsets = [0, 0], sizes = [2, 32], strides = [1, 1]} : vector<2x128xf32> to vector<2x32xf32>
    %166 = arith.negf %165 : vector<2x32xf32>
    %167 = math.exp %166 : vector<2x32xf32>
    %cst_59 = arith.constant 1.000000e+00 : f32
    %168 = vector.broadcast %cst_59 : f32 to vector<2x32xf32>
    %169 = arith.addf %168, %167 : vector<2x32xf32>
    %170 = arith.divf %168, %169 : vector<2x32xf32>
    %171 = vector.extract_strided_slice %164 {offsets = [0, 32], sizes = [2, 32], strides = [1, 1]} : vector<2x128xf32> to vector<2x32xf32>
    %172 = arith.negf %171 : vector<2x32xf32>
    %173 = math.exp %172 : vector<2x32xf32>
    %cst_60 = arith.constant 1.000000e+00 : f32
    %174 = vector.broadcast %cst_60 : f32 to vector<2x32xf32>
    %175 = arith.addf %174, %173 : vector<2x32xf32>
    %176 = arith.divf %174, %175 : vector<2x32xf32>
    %177 = vector.extract_strided_slice %164 {offsets = [0, 64], sizes = [2, 32], strides = [1, 1]} : vector<2x128xf32> to vector<2x32xf32>
    %178 = math.tanh %177 : vector<2x32xf32>
    %179 = vector.extract_strided_slice %164 {offsets = [0, 96], sizes = [2, 32], strides = [1, 1]} : vector<2x128xf32> to vector<2x32xf32>
    %180 = arith.negf %179 : vector<2x32xf32>
    %181 = math.exp %180 : vector<2x32xf32>
    %cst_61 = arith.constant 1.000000e+00 : f32
    %182 = vector.broadcast %cst_61 : f32 to vector<2x32xf32>
    %183 = arith.addf %182, %181 : vector<2x32xf32>
    %184 = arith.divf %182, %183 : vector<2x32xf32>
    %185 = arith.mulf %176, %117 : vector<2x32xf32>
    %186 = arith.mulf %170, %178 : vector<2x32xf32>
    %187 = arith.addf %185, %186 : vector<2x32xf32>
    %188 = math.tanh %187 : vector<2x32xf32>
    %189 = arith.mulf %184, %188 : vector<2x32xf32>
    %190 = tpu.concatenate %189, %148 in 1 : vector<2x32xf32>, vector<2x32xf32> -> vector<2x64xf32>
    %191 = arith.truncf %190 : vector<2x64xf32> to vector<2x64xbf16>
    %cst_62 = arith.constant dense<0.000000e+00> : vector<2x128xf32>
    %192 = tpu.matmul %191, %1, %cst_62 {dimension_numbers = #tpu.dot_dimension_numbers<[1], [0], [0], [1], [0, 0, 1, 1], [], []>} : vector<2x64xbf16>, vector<64x128xbf16>, vector<2x128xf32> -> vector<2x128xf32>
    %193 = arith.addf %192, %7 : vector<2x128xf32>
    %194 = vector.extract_strided_slice %193 {offsets = [0, 0], sizes = [2, 32], strides = [1, 1]} : vector<2x128xf32> to vector<2x32xf32>
    %195 = arith.negf %194 : vector<2x32xf32>
    %196 = math.exp %195 : vector<2x32xf32>
    %cst_63 = arith.constant 1.000000e+00 : f32
    %197 = vector.broadcast %cst_63 : f32 to vector<2x32xf32>
    %198 = arith.addf %197, %196 : vector<2x32xf32>
    %199 = arith.divf %197, %198 : vector<2x32xf32>
    %200 = vector.extract_strided_slice %193 {offsets = [0, 32], sizes = [2, 32], strides = [1, 1]} : vector<2x128xf32> to vector<2x32xf32>
    %201 = arith.negf %200 : vector<2x32xf32>
    %202 = math.exp %201 : vector<2x32xf32>
    %cst_64 = arith.constant 1.000000e+00 : f32
    %203 = vector.broadcast %cst_64 : f32 to vector<2x32xf32>
    %204 = arith.addf %203, %202 : vector<2x32xf32>
    %205 = arith.divf %203, %204 : vector<2x32xf32>
    %206 = vector.extract_strided_slice %193 {offsets = [0, 64], sizes = [2, 32], strides = [1, 1]} : vector<2x128xf32> to vector<2x32xf32>
    %207 = math.tanh %206 : vector<2x32xf32>
    %208 = vector.extract_strided_slice %193 {offsets = [0, 96], sizes = [2, 32], strides = [1, 1]} : vector<2x128xf32> to vector<2x32xf32>
    %209 = arith.negf %208 : vector<2x32xf32>
    %210 = math.exp %209 : vector<2x32xf32>
    %cst_65 = arith.constant 1.000000e+00 : f32
    %211 = vector.broadcast %cst_65 : f32 to vector<2x32xf32>
    %212 = arith.addf %211, %210 : vector<2x32xf32>
    %213 = arith.divf %211, %212 : vector<2x32xf32>
    %214 = arith.mulf %205, %146 : vector<2x32xf32>
    %215 = arith.mulf %199, %207 : vector<2x32xf32>
    %216 = arith.addf %214, %215 : vector<2x32xf32>
    %217 = math.tanh %216 : vector<2x32xf32>
    %218 = arith.mulf %213, %217 : vector<2x32xf32>
    %c2_66 = arith.constant 2 : index
    %c0_67 = arith.constant 0 : index
    %c0_68 = arith.constant 0 : index
    %219 = vector.load %arg11[%c2_66, %c0_67, %c0_68] : memref<8x2x32xf32, #tpu.memory_space<vmem>>, vector<1x2x32xf32>
    %220 = vector.shape_cast %219 : vector<1x2x32xf32> to vector<2x32xf32>
    %221 = vector.shape_cast %218 : vector<2x32xf32> to vector<1x2x32xf32>
    tpu.vector_store %arg11[%c2_66, %c0_67, %c0_68], %221 {strides = array<i32>} : memref<8x2x32xf32, #tpu.memory_space<vmem>>, vector<1x2x32xf32>,
    %c3 = arith.constant 3 : index
    %c0_69 = arith.constant 0 : index
    %222 = memref.load %arg1[%c3, %c0_69] : memref<8x2xi32, #tpu.memory_space<smem>>
    %223 = arith.index_cast %222 : i32 to index
    %c0_70 = arith.constant 0 : index
    %c0_71 = arith.constant 0 : index
    %224 = vector.load %arg2[%223, %c0_70, %c0_71] : memref<20x1x32xf32, #tpu.memory_space<vmem>>, vector<1x1x32xf32>
    %225 = vector.shape_cast %224 : vector<1x1x32xf32> to vector<1x32xf32>
    %c3_72 = arith.constant 3 : index
    %c1_73 = arith.constant 1 : index
    %226 = memref.load %arg1[%c3_72, %c1_73] : memref<8x2xi32, #tpu.memory_space<smem>>
    %227 = arith.index_cast %226 : i32 to index
    %c0_74 = arith.constant 0 : index
    %c0_75 = arith.constant 0 : index
    %228 = vector.load %arg2[%227, %c0_74, %c0_75] : memref<20x1x32xf32, #tpu.memory_space<vmem>>, vector<1x1x32xf32>
    %229 = vector.shape_cast %228 : vector<1x1x32xf32> to vector<1x32xf32>
    %230 = tpu.concatenate %225, %229 in 0 : vector<1x32xf32>, vector<1x32xf32> -> vector<2x32xf32>
    %231 = tpu.concatenate %230, %189 in 1 : vector<2x32xf32>, vector<2x32xf32> -> vector<2x64xf32>
    %232 = arith.truncf %231 : vector<2x64xf32> to vector<2x64xbf16>
    %cst_76 = arith.constant dense<0.000000e+00> : vector<2x128xf32>
    %233 = tpu.matmul %232, %0, %cst_76 {dimension_numbers = #tpu.dot_dimension_numbers<[1], [0], [0], [1], [0, 0, 1, 1], [], []>} : vector<2x64xbf16>, vector<64x128xbf16>, vector<2x128xf32> -> vector<2x128xf32>
    %234 = arith.addf %233, %4 : vector<2x128xf32>
    %235 = vector.extract_strided_slice %234 {offsets = [0, 0], sizes = [2, 32], strides = [1, 1]} : vector<2x128xf32> to vector<2x32xf32>
    %236 = arith.negf %235 : vector<2x32xf32>
    %237 = math.exp %236 : vector<2x32xf32>
    %cst_77 = arith.constant 1.000000e+00 : f32
    %238 = vector.broadcast %cst_77 : f32 to vector<2x32xf32>
    %239 = arith.addf %238, %237 : vector<2x32xf32>
    %240 = arith.divf %238, %239 : vector<2x32xf32>
    %241 = vector.extract_strided_slice %234 {offsets = [0, 32], sizes = [2, 32], strides = [1, 1]} : vector<2x128xf32> to vector<2x32xf32>
    %242 = arith.negf %241 : vector<2x32xf32>
    %243 = math.exp %242 : vector<2x32xf32>
    %cst_78 = arith.constant 1.000000e+00 : f32
    %244 = vector.broadcast %cst_78 : f32 to vector<2x32xf32>
    %245 = arith.addf %244, %243 : vector<2x32xf32>
    %246 = arith.divf %244, %245 : vector<2x32xf32>
    %247 = vector.extract_strided_slice %234 {offsets = [0, 64], sizes = [2, 32], strides = [1, 1]} : vector<2x128xf32> to vector<2x32xf32>
    %248 = math.tanh %247 : vector<2x32xf32>
    %249 = vector.extract_strided_slice %234 {offsets = [0, 96], sizes = [2, 32], strides = [1, 1]} : vector<2x128xf32> to vector<2x32xf32>
    %250 = arith.negf %249 : vector<2x32xf32>
    %251 = math.exp %250 : vector<2x32xf32>
    %cst_79 = arith.constant 1.000000e+00 : f32
    %252 = vector.broadcast %cst_79 : f32 to vector<2x32xf32>
    %253 = arith.addf %252, %251 : vector<2x32xf32>
    %254 = arith.divf %252, %253 : vector<2x32xf32>
    %255 = arith.mulf %246, %187 : vector<2x32xf32>
    %256 = arith.mulf %240, %248 : vector<2x32xf32>
    %257 = arith.addf %255, %256 : vector<2x32xf32>
    %258 = math.tanh %257 : vector<2x32xf32>
    %259 = arith.mulf %254, %258 : vector<2x32xf32>
    %260 = tpu.concatenate %259, %218 in 1 : vector<2x32xf32>, vector<2x32xf32> -> vector<2x64xf32>
    %261 = arith.truncf %260 : vector<2x64xf32> to vector<2x64xbf16>
    %cst_80 = arith.constant dense<0.000000e+00> : vector<2x128xf32>
    %262 = tpu.matmul %261, %1, %cst_80 {dimension_numbers = #tpu.dot_dimension_numbers<[1], [0], [0], [1], [0, 0, 1, 1], [], []>} : vector<2x64xbf16>, vector<64x128xbf16>, vector<2x128xf32> -> vector<2x128xf32>
    %263 = arith.addf %262, %7 : vector<2x128xf32>
    %264 = vector.extract_strided_slice %263 {offsets = [0, 0], sizes = [2, 32], strides = [1, 1]} : vector<2x128xf32> to vector<2x32xf32>
    %265 = arith.negf %264 : vector<2x32xf32>
    %266 = math.exp %265 : vector<2x32xf32>
    %cst_81 = arith.constant 1.000000e+00 : f32
    %267 = vector.broadcast %cst_81 : f32 to vector<2x32xf32>
    %268 = arith.addf %267, %266 : vector<2x32xf32>
    %269 = arith.divf %267, %268 : vector<2x32xf32>
    %270 = vector.extract_strided_slice %263 {offsets = [0, 32], sizes = [2, 32], strides = [1, 1]} : vector<2x128xf32> to vector<2x32xf32>
    %271 = arith.negf %270 : vector<2x32xf32>
    %272 = math.exp %271 : vector<2x32xf32>
    %cst_82 = arith.constant 1.000000e+00 : f32
    %273 = vector.broadcast %cst_82 : f32 to vector<2x32xf32>
    %274 = arith.addf %273, %272 : vector<2x32xf32>
    %275 = arith.divf %273, %274 : vector<2x32xf32>
    %276 = vector.extract_strided_slice %263 {offsets = [0, 64], sizes = [2, 32], strides = [1, 1]} : vector<2x128xf32> to vector<2x32xf32>
    %277 = math.tanh %276 : vector<2x32xf32>
    %278 = vector.extract_strided_slice %263 {offsets = [0, 96], sizes = [2, 32], strides = [1, 1]} : vector<2x128xf32> to vector<2x32xf32>
    %279 = arith.negf %278 : vector<2x32xf32>
    %280 = math.exp %279 : vector<2x32xf32>
    %cst_83 = arith.constant 1.000000e+00 : f32
    %281 = vector.broadcast %cst_83 : f32 to vector<2x32xf32>
    %282 = arith.addf %281, %280 : vector<2x32xf32>
    %283 = arith.divf %281, %282 : vector<2x32xf32>
    %284 = arith.mulf %275, %216 : vector<2x32xf32>
    %285 = arith.mulf %269, %277 : vector<2x32xf32>
    %286 = arith.addf %284, %285 : vector<2x32xf32>
    %287 = math.tanh %286 : vector<2x32xf32>
    %288 = arith.mulf %283, %287 : vector<2x32xf32>
    %c3_84 = arith.constant 3 : index
    %c0_85 = arith.constant 0 : index
    %c0_86 = arith.constant 0 : index
    %289 = vector.load %arg11[%c3_84, %c0_85, %c0_86] : memref<8x2x32xf32, #tpu.memory_space<vmem>>, vector<1x2x32xf32>
    %290 = vector.shape_cast %289 : vector<1x2x32xf32> to vector<2x32xf32>
    %291 = vector.shape_cast %288 : vector<2x32xf32> to vector<1x2x32xf32>
    tpu.vector_store %arg11[%c3_84, %c0_85, %c0_86], %291 {strides = array<i32>} : memref<8x2x32xf32, #tpu.memory_space<vmem>>, vector<1x2x32xf32>,
    %c4 = arith.constant 4 : index
    %c0_87 = arith.constant 0 : index
    %292 = memref.load %arg1[%c4, %c0_87] : memref<8x2xi32, #tpu.memory_space<smem>>
    %293 = arith.index_cast %292 : i32 to index
    %c0_88 = arith.constant 0 : index
    %c0_89 = arith.constant 0 : index
    %294 = vector.load %arg2[%293, %c0_88, %c0_89] : memref<20x1x32xf32, #tpu.memory_space<vmem>>, vector<1x1x32xf32>
    %295 = vector.shape_cast %294 : vector<1x1x32xf32> to vector<1x32xf32>
    %c4_90 = arith.constant 4 : index
    %c1_91 = arith.constant 1 : index
    %296 = memref.load %arg1[%c4_90, %c1_91] : memref<8x2xi32, #tpu.memory_space<smem>>
    %297 = arith.index_cast %296 : i32 to index
    %c0_92 = arith.constant 0 : index
    %c0_93 = arith.constant 0 : index
    %298 = vector.load %arg2[%297, %c0_92, %c0_93] : memref<20x1x32xf32, #tpu.memory_space<vmem>>, vector<1x1x32xf32>
    %299 = vector.shape_cast %298 : vector<1x1x32xf32> to vector<1x32xf32>
    %300 = tpu.concatenate %295, %299 in 0 : vector<1x32xf32>, vector<1x32xf32> -> vector<2x32xf32>
    %301 = tpu.concatenate %300, %259 in 1 : vector<2x32xf32>, vector<2x32xf32> -> vector<2x64xf32>
    %302 = arith.truncf %301 : vector<2x64xf32> to vector<2x64xbf16>
    %cst_94 = arith.constant dense<0.000000e+00> : vector<2x128xf32>
    %303 = tpu.matmul %302, %0, %cst_94 {dimension_numbers = #tpu.dot_dimension_numbers<[1], [0], [0], [1], [0, 0, 1, 1], [], []>} : vector<2x64xbf16>, vector<64x128xbf16>, vector<2x128xf32> -> vector<2x128xf32>
    %304 = arith.addf %303, %4 : vector<2x128xf32>
    %305 = vector.extract_strided_slice %304 {offsets = [0, 0], sizes = [2, 32], strides = [1, 1]} : vector<2x128xf32> to vector<2x32xf32>
    %306 = arith.negf %305 : vector<2x32xf32>
    %307 = math.exp %306 : vector<2x32xf32>
    %cst_95 = arith.constant 1.000000e+00 : f32
    %308 = vector.broadcast %cst_95 : f32 to vector<2x32xf32>
    %309 = arith.addf %308, %307 : vector<2x32xf32>
    %310 = arith.divf %308, %309 : vector<2x32xf32>
    %311 = vector.extract_strided_slice %304 {offsets = [0, 32], sizes = [2, 32], strides = [1, 1]} : vector<2x128xf32> to vector<2x32xf32>
    %312 = arith.negf %311 : vector<2x32xf32>
    %313 = math.exp %312 : vector<2x32xf32>
    %cst_96 = arith.constant 1.000000e+00 : f32
    %314 = vector.broadcast %cst_96 : f32 to vector<2x32xf32>
    %315 = arith.addf %314, %313 : vector<2x32xf32>
    %316 = arith.divf %314, %315 : vector<2x32xf32>
    %317 = vector.extract_strided_slice %304 {offsets = [0, 64], sizes = [2, 32], strides = [1, 1]} : vector<2x128xf32> to vector<2x32xf32>
    %318 = math.tanh %317 : vector<2x32xf32>
    %319 = vector.extract_strided_slice %304 {offsets = [0, 96], sizes = [2, 32], strides = [1, 1]} : vector<2x128xf32> to vector<2x32xf32>
    %320 = arith.negf %319 : vector<2x32xf32>
    %321 = math.exp %320 : vector<2x32xf32>
    %cst_97 = arith.constant 1.000000e+00 : f32
    %322 = vector.broadcast %cst_97 : f32 to vector<2x32xf32>
    %323 = arith.addf %322, %321 : vector<2x32xf32>
    %324 = arith.divf %322, %323 : vector<2x32xf32>
    %325 = arith.mulf %316, %257 : vector<2x32xf32>
    %326 = arith.mulf %310, %318 : vector<2x32xf32>
    %327 = arith.addf %325, %326 : vector<2x32xf32>
    %328 = math.tanh %327 : vector<2x32xf32>
    %329 = arith.mulf %324, %328 : vector<2x32xf32>
    %330 = tpu.concatenate %329, %288 in 1 : vector<2x32xf32>, vector<2x32xf32> -> vector<2x64xf32>
    %331 = arith.truncf %330 : vector<2x64xf32> to vector<2x64xbf16>
    %cst_98 = arith.constant dense<0.000000e+00> : vector<2x128xf32>
    %332 = tpu.matmul %331, %1, %cst_98 {dimension_numbers = #tpu.dot_dimension_numbers<[1], [0], [0], [1], [0, 0, 1, 1], [], []>} : vector<2x64xbf16>, vector<64x128xbf16>, vector<2x128xf32> -> vector<2x128xf32>
    %333 = arith.addf %332, %7 : vector<2x128xf32>
    %334 = vector.extract_strided_slice %333 {offsets = [0, 0], sizes = [2, 32], strides = [1, 1]} : vector<2x128xf32> to vector<2x32xf32>
    %335 = arith.negf %334 : vector<2x32xf32>
    %336 = math.exp %335 : vector<2x32xf32>
    %cst_99 = arith.constant 1.000000e+00 : f32
    %337 = vector.broadcast %cst_99 : f32 to vector<2x32xf32>
    %338 = arith.addf %337, %336 : vector<2x32xf32>
    %339 = arith.divf %337, %338 : vector<2x32xf32>
    %340 = vector.extract_strided_slice %333 {offsets = [0, 32], sizes = [2, 32], strides = [1, 1]} : vector<2x128xf32> to vector<2x32xf32>
    %341 = arith.negf %340 : vector<2x32xf32>
    %342 = math.exp %341 : vector<2x32xf32>
    %cst_100 = arith.constant 1.000000e+00 : f32
    %343 = vector.broadcast %cst_100 : f32 to vector<2x32xf32>
    %344 = arith.addf %343, %342 : vector<2x32xf32>
    %345 = arith.divf %343, %344 : vector<2x32xf32>
    %346 = vector.extract_strided_slice %333 {offsets = [0, 64], sizes = [2, 32], strides = [1, 1]} : vector<2x128xf32> to vector<2x32xf32>
    %347 = math.tanh %346 : vector<2x32xf32>
    %348 = vector.extract_strided_slice %333 {offsets = [0, 96], sizes = [2, 32], strides = [1, 1]} : vector<2x128xf32> to vector<2x32xf32>
    %349 = arith.negf %348 : vector<2x32xf32>
    %350 = math.exp %349 : vector<2x32xf32>
    %cst_101 = arith.constant 1.000000e+00 : f32
    %351 = vector.broadcast %cst_101 : f32 to vector<2x32xf32>
    %352 = arith.addf %351, %350 : vector<2x32xf32>
    %353 = arith.divf %351, %352 : vector<2x32xf32>
    %354 = arith.mulf %345, %286 : vector<2x32xf32>
    %355 = arith.mulf %339, %347 : vector<2x32xf32>
    %356 = arith.addf %354, %355 : vector<2x32xf32>
    %357 = math.tanh %356 : vector<2x32xf32>
    %358 = arith.mulf %353, %357 : vector<2x32xf32>
    %c4_102 = arith.constant 4 : index
    %c0_103 = arith.constant 0 : index
    %c0_104 = arith.constant 0 : index
    %359 = vector.load %arg11[%c4_102, %c0_103, %c0_104] : memref<8x2x32xf32, #tpu.memory_space<vmem>>, vector<1x2x32xf32>
    %360 = vector.shape_cast %359 : vector<1x2x32xf32> to vector<2x32xf32>
    %361 = vector.shape_cast %358 : vector<2x32xf32> to vector<1x2x32xf32>
    tpu.vector_store %arg11[%c4_102, %c0_103, %c0_104], %361 {strides = array<i32>} : memref<8x2x32xf32, #tpu.memory_space<vmem>>, vector<1x2x32xf32>,
    %c5 = arith.constant 5 : index
    %c0_105 = arith.constant 0 : index
    %362 = memref.load %arg1[%c5, %c0_105] : memref<8x2xi32, #tpu.memory_space<smem>>
    %363 = arith.index_cast %362 : i32 to index
    %c0_106 = arith.constant 0 : index
    %c0_107 = arith.constant 0 : index
    %364 = vector.load %arg2[%363, %c0_106, %c0_107] : memref<20x1x32xf32, #tpu.memory_space<vmem>>, vector<1x1x32xf32>
    %365 = vector.shape_cast %364 : vector<1x1x32xf32> to vector<1x32xf32>
    %c5_108 = arith.constant 5 : index
    %c1_109 = arith.constant 1 : index
    %366 = memref.load %arg1[%c5_108, %c1_109] : memref<8x2xi32, #tpu.memory_space<smem>>
    %367 = arith.index_cast %366 : i32 to index
    %c0_110 = arith.constant 0 : index
    %c0_111 = arith.constant 0 : index
    %368 = vector.load %arg2[%367, %c0_110, %c0_111] : memref<20x1x32xf32, #tpu.memory_space<vmem>>, vector<1x1x32xf32>
    %369 = vector.shape_cast %368 : vector<1x1x32xf32> to vector<1x32xf32>
    %370 = tpu.concatenate %365, %369 in 0 : vector<1x32xf32>, vector<1x32xf32> -> vector<2x32xf32>
    %371 = tpu.concatenate %370, %329 in 1 : vector<2x32xf32>, vector<2x32xf32> -> vector<2x64xf32>
    %372 = arith.truncf %371 : vector<2x64xf32> to vector<2x64xbf16>
    %cst_112 = arith.constant dense<0.000000e+00> : vector<2x128xf32>
    %373 = tpu.matmul %372, %0, %cst_112 {dimension_numbers = #tpu.dot_dimension_numbers<[1], [0], [0], [1], [0, 0, 1, 1], [], []>} : vector<2x64xbf16>, vector<64x128xbf16>, vector<2x128xf32> -> vector<2x128xf32>
    %374 = arith.addf %373, %4 : vector<2x128xf32>
    %375 = vector.extract_strided_slice %374 {offsets = [0, 0], sizes = [2, 32], strides = [1, 1]} : vector<2x128xf32> to vector<2x32xf32>
    %376 = arith.negf %375 : vector<2x32xf32>
    %377 = math.exp %376 : vector<2x32xf32>
    %cst_113 = arith.constant 1.000000e+00 : f32
    %378 = vector.broadcast %cst_113 : f32 to vector<2x32xf32>
    %379 = arith.addf %378, %377 : vector<2x32xf32>
    %380 = arith.divf %378, %379 : vector<2x32xf32>
    %381 = vector.extract_strided_slice %374 {offsets = [0, 32], sizes = [2, 32], strides = [1, 1]} : vector<2x128xf32> to vector<2x32xf32>
    %382 = arith.negf %381 : vector<2x32xf32>
    %383 = math.exp %382 : vector<2x32xf32>
    %cst_114 = arith.constant 1.000000e+00 : f32
    %384 = vector.broadcast %cst_114 : f32 to vector<2x32xf32>
    %385 = arith.addf %384, %383 : vector<2x32xf32>
    %386 = arith.divf %384, %385 : vector<2x32xf32>
    %387 = vector.extract_strided_slice %374 {offsets = [0, 64], sizes = [2, 32], strides = [1, 1]} : vector<2x128xf32> to vector<2x32xf32>
    %388 = math.tanh %387 : vector<2x32xf32>
    %389 = vector.extract_strided_slice %374 {offsets = [0, 96], sizes = [2, 32], strides = [1, 1]} : vector<2x128xf32> to vector<2x32xf32>
    %390 = arith.negf %389 : vector<2x32xf32>
    %391 = math.exp %390 : vector<2x32xf32>
    %cst_115 = arith.constant 1.000000e+00 : f32
    %392 = vector.broadcast %cst_115 : f32 to vector<2x32xf32>
    %393 = arith.addf %392, %391 : vector<2x32xf32>
    %394 = arith.divf %392, %393 : vector<2x32xf32>
    %395 = arith.mulf %386, %327 : vector<2x32xf32>
    %396 = arith.mulf %380, %388 : vector<2x32xf32>
    %397 = arith.addf %395, %396 : vector<2x32xf32>
    %398 = math.tanh %397 : vector<2x32xf32>
    %399 = arith.mulf %394, %398 : vector<2x32xf32>
    %400 = tpu.concatenate %399, %358 in 1 : vector<2x32xf32>, vector<2x32xf32> -> vector<2x64xf32>
    %401 = arith.truncf %400 : vector<2x64xf32> to vector<2x64xbf16>
    %cst_116 = arith.constant dense<0.000000e+00> : vector<2x128xf32>
    %402 = tpu.matmul %401, %1, %cst_116 {dimension_numbers = #tpu.dot_dimension_numbers<[1], [0], [0], [1], [0, 0, 1, 1], [], []>} : vector<2x64xbf16>, vector<64x128xbf16>, vector<2x128xf32> -> vector<2x128xf32>
    %403 = arith.addf %402, %7 : vector<2x128xf32>
    %404 = vector.extract_strided_slice %403 {offsets = [0, 0], sizes = [2, 32], strides = [1, 1]} : vector<2x128xf32> to vector<2x32xf32>
    %405 = arith.negf %404 : vector<2x32xf32>
    %406 = math.exp %405 : vector<2x32xf32>
    %cst_117 = arith.constant 1.000000e+00 : f32
    %407 = vector.broadcast %cst_117 : f32 to vector<2x32xf32>
    %408 = arith.addf %407, %406 : vector<2x32xf32>
    %409 = arith.divf %407, %408 : vector<2x32xf32>
    %410 = vector.extract_strided_slice %403 {offsets = [0, 32], sizes = [2, 32], strides = [1, 1]} : vector<2x128xf32> to vector<2x32xf32>
    %411 = arith.negf %410 : vector<2x32xf32>
    %412 = math.exp %411 : vector<2x32xf32>
    %cst_118 = arith.constant 1.000000e+00 : f32
    %413 = vector.broadcast %cst_118 : f32 to vector<2x32xf32>
    %414 = arith.addf %413, %412 : vector<2x32xf32>
    %415 = arith.divf %413, %414 : vector<2x32xf32>
    %416 = vector.extract_strided_slice %403 {offsets = [0, 64], sizes = [2, 32], strides = [1, 1]} : vector<2x128xf32> to vector<2x32xf32>
    %417 = math.tanh %416 : vector<2x32xf32>
    %418 = vector.extract_strided_slice %403 {offsets = [0, 96], sizes = [2, 32], strides = [1, 1]} : vector<2x128xf32> to vector<2x32xf32>
    %419 = arith.negf %418 : vector<2x32xf32>
    %420 = math.exp %419 : vector<2x32xf32>
    %cst_119 = arith.constant 1.000000e+00 : f32
    %421 = vector.broadcast %cst_119 : f32 to vector<2x32xf32>
    %422 = arith.addf %421, %420 : vector<2x32xf32>
    %423 = arith.divf %421, %422 : vector<2x32xf32>
    %424 = arith.mulf %415, %356 : vector<2x32xf32>
    %425 = arith.mulf %409, %417 : vector<2x32xf32>
    %426 = arith.addf %424, %425 : vector<2x32xf32>
    %427 = math.tanh %426 : vector<2x32xf32>
    %428 = arith.mulf %423, %427 : vector<2x32xf32>
    %c5_120 = arith.constant 5 : index
    %c0_121 = arith.constant 0 : index
    %c0_122 = arith.constant 0 : index
    %429 = vector.load %arg11[%c5_120, %c0_121, %c0_122] : memref<8x2x32xf32, #tpu.memory_space<vmem>>, vector<1x2x32xf32>
    %430 = vector.shape_cast %429 : vector<1x2x32xf32> to vector<2x32xf32>
    %431 = vector.shape_cast %428 : vector<2x32xf32> to vector<1x2x32xf32>
    tpu.vector_store %arg11[%c5_120, %c0_121, %c0_122], %431 {strides = array<i32>} : memref<8x2x32xf32, #tpu.memory_space<vmem>>, vector<1x2x32xf32>,
    %c6 = arith.constant 6 : index
    %c0_123 = arith.constant 0 : index
    %432 = memref.load %arg1[%c6, %c0_123] : memref<8x2xi32, #tpu.memory_space<smem>>
    %433 = arith.index_cast %432 : i32 to index
    %c0_124 = arith.constant 0 : index
    %c0_125 = arith.constant 0 : index
    %434 = vector.load %arg2[%433, %c0_124, %c0_125] : memref<20x1x32xf32, #tpu.memory_space<vmem>>, vector<1x1x32xf32>
    %435 = vector.shape_cast %434 : vector<1x1x32xf32> to vector<1x32xf32>
    %c6_126 = arith.constant 6 : index
    %c1_127 = arith.constant 1 : index
    %436 = memref.load %arg1[%c6_126, %c1_127] : memref<8x2xi32, #tpu.memory_space<smem>>
    %437 = arith.index_cast %436 : i32 to index
    %c0_128 = arith.constant 0 : index
    %c0_129 = arith.constant 0 : index
    %438 = vector.load %arg2[%437, %c0_128, %c0_129] : memref<20x1x32xf32, #tpu.memory_space<vmem>>, vector<1x1x32xf32>
    %439 = vector.shape_cast %438 : vector<1x1x32xf32> to vector<1x32xf32>
    %440 = tpu.concatenate %435, %439 in 0 : vector<1x32xf32>, vector<1x32xf32> -> vector<2x32xf32>
    %441 = tpu.concatenate %440, %399 in 1 : vector<2x32xf32>, vector<2x32xf32> -> vector<2x64xf32>
    %442 = arith.truncf %441 : vector<2x64xf32> to vector<2x64xbf16>
    %cst_130 = arith.constant dense<0.000000e+00> : vector<2x128xf32>
    %443 = tpu.matmul %442, %0, %cst_130 {dimension_numbers = #tpu.dot_dimension_numbers<[1], [0], [0], [1], [0, 0, 1, 1], [], []>} : vector<2x64xbf16>, vector<64x128xbf16>, vector<2x128xf32> -> vector<2x128xf32>
    %444 = arith.addf %443, %4 : vector<2x128xf32>
    %445 = vector.extract_strided_slice %444 {offsets = [0, 0], sizes = [2, 32], strides = [1, 1]} : vector<2x128xf32> to vector<2x32xf32>
    %446 = arith.negf %445 : vector<2x32xf32>
    %447 = math.exp %446 : vector<2x32xf32>
    %cst_131 = arith.constant 1.000000e+00 : f32
    %448 = vector.broadcast %cst_131 : f32 to vector<2x32xf32>
    %449 = arith.addf %448, %447 : vector<2x32xf32>
    %450 = arith.divf %448, %449 : vector<2x32xf32>
    %451 = vector.extract_strided_slice %444 {offsets = [0, 32], sizes = [2, 32], strides = [1, 1]} : vector<2x128xf32> to vector<2x32xf32>
    %452 = arith.negf %451 : vector<2x32xf32>
    %453 = math.exp %452 : vector<2x32xf32>
    %cst_132 = arith.constant 1.000000e+00 : f32
    %454 = vector.broadcast %cst_132 : f32 to vector<2x32xf32>
    %455 = arith.addf %454, %453 : vector<2x32xf32>
    %456 = arith.divf %454, %455 : vector<2x32xf32>
    %457 = vector.extract_strided_slice %444 {offsets = [0, 64], sizes = [2, 32], strides = [1, 1]} : vector<2x128xf32> to vector<2x32xf32>
    %458 = math.tanh %457 : vector<2x32xf32>
    %459 = vector.extract_strided_slice %444 {offsets = [0, 96], sizes = [2, 32], strides = [1, 1]} : vector<2x128xf32> to vector<2x32xf32>
    %460 = arith.negf %459 : vector<2x32xf32>
    %461 = math.exp %460 : vector<2x32xf32>
    %cst_133 = arith.constant 1.000000e+00 : f32
    %462 = vector.broadcast %cst_133 : f32 to vector<2x32xf32>
    %463 = arith.addf %462, %461 : vector<2x32xf32>
    %464 = arith.divf %462, %463 : vector<2x32xf32>
    %465 = arith.mulf %456, %397 : vector<2x32xf32>
    %466 = arith.mulf %450, %458 : vector<2x32xf32>
    %467 = arith.addf %465, %466 : vector<2x32xf32>
    %468 = math.tanh %467 : vector<2x32xf32>
    %469 = arith.mulf %464, %468 : vector<2x32xf32>
    %470 = tpu.concatenate %469, %428 in 1 : vector<2x32xf32>, vector<2x32xf32> -> vector<2x64xf32>
    %471 = arith.truncf %470 : vector<2x64xf32> to vector<2x64xbf16>
    %cst_134 = arith.constant dense<0.000000e+00> : vector<2x128xf32>
    %472 = tpu.matmul %471, %1, %cst_134 {dimension_numbers = #tpu.dot_dimension_numbers<[1], [0], [0], [1], [0, 0, 1, 1], [], []>} : vector<2x64xbf16>, vector<64x128xbf16>, vector<2x128xf32> -> vector<2x128xf32>
    %473 = arith.addf %472, %7 : vector<2x128xf32>
    %474 = vector.extract_strided_slice %473 {offsets = [0, 0], sizes = [2, 32], strides = [1, 1]} : vector<2x128xf32> to vector<2x32xf32>
    %475 = arith.negf %474 : vector<2x32xf32>
    %476 = math.exp %475 : vector<2x32xf32>
    %cst_135 = arith.constant 1.000000e+00 : f32
    %477 = vector.broadcast %cst_135 : f32 to vector<2x32xf32>
    %478 = arith.addf %477, %476 : vector<2x32xf32>
    %479 = arith.divf %477, %478 : vector<2x32xf32>
    %480 = vector.extract_strided_slice %473 {offsets = [0, 32], sizes = [2, 32], strides = [1, 1]} : vector<2x128xf32> to vector<2x32xf32>
    %481 = arith.negf %480 : vector<2x32xf32>
    %482 = math.exp %481 : vector<2x32xf32>
    %cst_136 = arith.constant 1.000000e+00 : f32
    %483 = vector.broadcast %cst_136 : f32 to vector<2x32xf32>
    %484 = arith.addf %483, %482 : vector<2x32xf32>
    %485 = arith.divf %483, %484 : vector<2x32xf32>
    %486 = vector.extract_strided_slice %473 {offsets = [0, 64], sizes = [2, 32], strides = [1, 1]} : vector<2x128xf32> to vector<2x32xf32>
    %487 = math.tanh %486 : vector<2x32xf32>
    %488 = vector.extract_strided_slice %473 {offsets = [0, 96], sizes = [2, 32], strides = [1, 1]} : vector<2x128xf32> to vector<2x32xf32>
    %489 = arith.negf %488 : vector<2x32xf32>
    %490 = math.exp %489 : vector<2x32xf32>
    %cst_137 = arith.constant 1.000000e+00 : f32
    %491 = vector.broadcast %cst_137 : f32 to vector<2x32xf32>
    %492 = arith.addf %491, %490 : vector<2x32xf32>
    %493 = arith.divf %491, %492 : vector<2x32xf32>
    %494 = arith.mulf %485, %426 : vector<2x32xf32>
    %495 = arith.mulf %479, %487 : vector<2x32xf32>
    %496 = arith.addf %494, %495 : vector<2x32xf32>
    %497 = math.tanh %496 : vector<2x32xf32>
    %498 = arith.mulf %493, %497 : vector<2x32xf32>
    %c6_138 = arith.constant 6 : index
    %c0_139 = arith.constant 0 : index
    %c0_140 = arith.constant 0 : index
    %499 = vector.load %arg11[%c6_138, %c0_139, %c0_140] : memref<8x2x32xf32, #tpu.memory_space<vmem>>, vector<1x2x32xf32>
    %500 = vector.shape_cast %499 : vector<1x2x32xf32> to vector<2x32xf32>
    %501 = vector.shape_cast %498 : vector<2x32xf32> to vector<1x2x32xf32>
    tpu.vector_store %arg11[%c6_138, %c0_139, %c0_140], %501 {strides = array<i32>} : memref<8x2x32xf32, #tpu.memory_space<vmem>>, vector<1x2x32xf32>,
    %c7 = arith.constant 7 : index
    %c0_141 = arith.constant 0 : index
    %502 = memref.load %arg1[%c7, %c0_141] : memref<8x2xi32, #tpu.memory_space<smem>>
    %503 = arith.index_cast %502 : i32 to index
    %c0_142 = arith.constant 0 : index
    %c0_143 = arith.constant 0 : index
    %504 = vector.load %arg2[%503, %c0_142, %c0_143] : memref<20x1x32xf32, #tpu.memory_space<vmem>>, vector<1x1x32xf32>
    %505 = vector.shape_cast %504 : vector<1x1x32xf32> to vector<1x32xf32>
    %c7_144 = arith.constant 7 : index
    %c1_145 = arith.constant 1 : index
    %506 = memref.load %arg1[%c7_144, %c1_145] : memref<8x2xi32, #tpu.memory_space<smem>>
    %507 = arith.index_cast %506 : i32 to index
    %c0_146 = arith.constant 0 : index
    %c0_147 = arith.constant 0 : index
    %508 = vector.load %arg2[%507, %c0_146, %c0_147] : memref<20x1x32xf32, #tpu.memory_space<vmem>>, vector<1x1x32xf32>
    %509 = vector.shape_cast %508 : vector<1x1x32xf32> to vector<1x32xf32>
    %510 = tpu.concatenate %505, %509 in 0 : vector<1x32xf32>, vector<1x32xf32> -> vector<2x32xf32>
    %511 = tpu.concatenate %510, %469 in 1 : vector<2x32xf32>, vector<2x32xf32> -> vector<2x64xf32>
    %512 = arith.truncf %511 : vector<2x64xf32> to vector<2x64xbf16>
    %cst_148 = arith.constant dense<0.000000e+00> : vector<2x128xf32>
    %513 = tpu.matmul %512, %0, %cst_148 {dimension_numbers = #tpu.dot_dimension_numbers<[1], [0], [0], [1], [0, 0, 1, 1], [], []>} : vector<2x64xbf16>, vector<64x128xbf16>, vector<2x128xf32> -> vector<2x128xf32>
    %514 = arith.addf %513, %4 : vector<2x128xf32>
    %515 = vector.extract_strided_slice %514 {offsets = [0, 0], sizes = [2, 32], strides = [1, 1]} : vector<2x128xf32> to vector<2x32xf32>
    %516 = arith.negf %515 : vector<2x32xf32>
    %517 = math.exp %516 : vector<2x32xf32>
    %cst_149 = arith.constant 1.000000e+00 : f32
    %518 = vector.broadcast %cst_149 : f32 to vector<2x32xf32>
    %519 = arith.addf %518, %517 : vector<2x32xf32>
    %520 = arith.divf %518, %519 : vector<2x32xf32>
    %521 = vector.extract_strided_slice %514 {offsets = [0, 32], sizes = [2, 32], strides = [1, 1]} : vector<2x128xf32> to vector<2x32xf32>
    %522 = arith.negf %521 : vector<2x32xf32>
    %523 = math.exp %522 : vector<2x32xf32>
    %cst_150 = arith.constant 1.000000e+00 : f32
    %524 = vector.broadcast %cst_150 : f32 to vector<2x32xf32>
    %525 = arith.addf %524, %523 : vector<2x32xf32>
    %526 = arith.divf %524, %525 : vector<2x32xf32>
    %527 = vector.extract_strided_slice %514 {offsets = [0, 64], sizes = [2, 32], strides = [1, 1]} : vector<2x128xf32> to vector<2x32xf32>
    %528 = math.tanh %527 : vector<2x32xf32>
    %529 = vector.extract_strided_slice %514 {offsets = [0, 96], sizes = [2, 32], strides = [1, 1]} : vector<2x128xf32> to vector<2x32xf32>
    %530 = arith.negf %529 : vector<2x32xf32>
    %531 = math.exp %530 : vector<2x32xf32>
    %cst_151 = arith.constant 1.000000e+00 : f32
    %532 = vector.broadcast %cst_151 : f32 to vector<2x32xf32>
    %533 = arith.addf %532, %531 : vector<2x32xf32>
    %534 = arith.divf %532, %533 : vector<2x32xf32>
    %535 = arith.mulf %526, %467 : vector<2x32xf32>
    %536 = arith.mulf %520, %528 : vector<2x32xf32>
    %537 = arith.addf %535, %536 : vector<2x32xf32>
    %538 = math.tanh %537 : vector<2x32xf32>
    %539 = arith.mulf %534, %538 : vector<2x32xf32>
    %540 = tpu.concatenate %539, %498 in 1 : vector<2x32xf32>, vector<2x32xf32> -> vector<2x64xf32>
    %541 = arith.truncf %540 : vector<2x64xf32> to vector<2x64xbf16>
    %cst_152 = arith.constant dense<0.000000e+00> : vector<2x128xf32>
    %542 = tpu.matmul %541, %1, %cst_152 {dimension_numbers = #tpu.dot_dimension_numbers<[1], [0], [0], [1], [0, 0, 1, 1], [], []>} : vector<2x64xbf16>, vector<64x128xbf16>, vector<2x128xf32> -> vector<2x128xf32>
    %543 = arith.addf %542, %7 : vector<2x128xf32>
    %544 = vector.extract_strided_slice %543 {offsets = [0, 0], sizes = [2, 32], strides = [1, 1]} : vector<2x128xf32> to vector<2x32xf32>
    %545 = arith.negf %544 : vector<2x32xf32>
    %546 = math.exp %545 : vector<2x32xf32>
    %cst_153 = arith.constant 1.000000e+00 : f32
    %547 = vector.broadcast %cst_153 : f32 to vector<2x32xf32>
    %548 = arith.addf %547, %546 : vector<2x32xf32>
    %549 = arith.divf %547, %548 : vector<2x32xf32>
    %550 = vector.extract_strided_slice %543 {offsets = [0, 32], sizes = [2, 32], strides = [1, 1]} : vector<2x128xf32> to vector<2x32xf32>
    %551 = arith.negf %550 : vector<2x32xf32>
    %552 = math.exp %551 : vector<2x32xf32>
    %cst_154 = arith.constant 1.000000e+00 : f32
    %553 = vector.broadcast %cst_154 : f32 to vector<2x32xf32>
    %554 = arith.addf %553, %552 : vector<2x32xf32>
    %555 = arith.divf %553, %554 : vector<2x32xf32>
    %556 = vector.extract_strided_slice %543 {offsets = [0, 64], sizes = [2, 32], strides = [1, 1]} : vector<2x128xf32> to vector<2x32xf32>
    %557 = math.tanh %556 : vector<2x32xf32>
    %558 = vector.extract_strided_slice %543 {offsets = [0, 96], sizes = [2, 32], strides = [1, 1]} : vector<2x128xf32> to vector<2x32xf32>
    %559 = arith.negf %558 : vector<2x32xf32>
    %560 = math.exp %559 : vector<2x32xf32>
    %cst_155 = arith.constant 1.000000e+00 : f32
    %561 = vector.broadcast %cst_155 : f32 to vector<2x32xf32>
    %562 = arith.addf %561, %560 : vector<2x32xf32>
    %563 = arith.divf %561, %562 : vector<2x32xf32>
    %564 = arith.mulf %555, %496 : vector<2x32xf32>
    %565 = arith.mulf %549, %557 : vector<2x32xf32>
    %566 = arith.addf %564, %565 : vector<2x32xf32>
    %567 = math.tanh %566 : vector<2x32xf32>
    %568 = arith.mulf %563, %567 : vector<2x32xf32>
    %c7_156 = arith.constant 7 : index
    %c0_157 = arith.constant 0 : index
    %c0_158 = arith.constant 0 : index
    %569 = vector.load %arg11[%c7_156, %c0_157, %c0_158] : memref<8x2x32xf32, #tpu.memory_space<vmem>>, vector<1x2x32xf32>
    %570 = vector.shape_cast %569 : vector<1x2x32xf32> to vector<2x32xf32>
    %571 = vector.shape_cast %568 : vector<2x32xf32> to vector<1x2x32xf32>
    tpu.vector_store %arg11[%c7_156, %c0_157, %c0_158], %571 {strides = array<i32>} : memref<8x2x32xf32, #tpu.memory_space<vmem>>, vector<1x2x32xf32>,
    %c0_159 = arith.constant 0 : index
    %c0_160 = arith.constant 0 : index
    %572 = vector.load %arg12[%c0_159, %c0_160] : memref<2x32xf32, #tpu.memory_space<vmem>>, vector<2x32xf32>
    tpu.vector_store %arg12[%c0_159, %c0_160], %539 {strides = array<i32>} : memref<2x32xf32, #tpu.memory_space<vmem>>, vector<2x32xf32>,
    %c0_161 = arith.constant 0 : index
    %c0_162 = arith.constant 0 : index
    %573 = vector.load %arg13[%c0_161, %c0_162] : memref<2x32xf32, #tpu.memory_space<vmem>>, vector<2x32xf32>
    tpu.vector_store %arg13[%c0_161, %c0_162], %537 {strides = array<i32>} : memref<2x32xf32, #tpu.memory_space<vmem>>, vector<2x32xf32>,
    %c0_163 = arith.constant 0 : index
    %c0_164 = arith.constant 0 : index
    %574 = vector.load %arg14[%c0_163, %c0_164] : memref<2x32xf32, #tpu.memory_space<vmem>>, vector<2x32xf32>
    tpu.vector_store %arg14[%c0_163, %c0_164], %568 {strides = array<i32>} : memref<2x32xf32, #tpu.memory_space<vmem>>, vector<2x32xf32>,
    %c0_165 = arith.constant 0 : index
    %c0_166 = arith.constant 0 : index
    %575 = vector.load %arg15[%c0_165, %c0_166] : memref<2x32xf32, #tpu.memory_space<vmem>>, vector<2x32xf32>
    tpu.vector_store %arg15[%c0_165, %c0_166], %566 {strides = array<i32>} : memref<2x32xf32, #tpu.memory_space<vmem>>, vector<2x32xf32>,
    return
  }
  func.func @transform_0(%arg0: i32, %arg1: memref<8x2xi32, #tpu.memory_space<smem>>) -> (i32, i32, i32) {
    %c0_i32 = arith.constant 0 : i32
    %c0_i32_0 = arith.constant 0 : i32
    %c0_i32_1 = arith.constant 0 : i32
    %c0_i32_2 = arith.constant 0 : i32
    return %c0_i32, %c0_i32_0, %c0_i32_1 : i32, i32, i32
  }
  func.func @transform_1(%arg0: i32, %arg1: memref<8x2xi32, #tpu.memory_space<smem>>) -> (i32, i32) {
    %c0_i32 = arith.constant 0 : i32
    %c0_i32_0 = arith.constant 0 : i32
    %c0_i32_1 = arith.constant 0 : i32
    return %c0_i32, %c0_i32_0 : i32, i32
  }
  func.func @transform_2(%arg0: i32, %arg1: memref<8x2xi32, #tpu.memory_space<smem>>) -> (i32, i32) {
    %c0_i32 = arith.constant 0 : i32
    %c0_i32_0 = arith.constant 0 : i32
    %c0_i32_1 = arith.constant 0 : i32
    return %c0_i32, %c0_i32_0 : i32, i32
  }
  func.func @transform_3(%arg0: i32, %arg1: memref<8x2xi32, #tpu.memory_space<smem>>) -> (i32, i32) {
    %c0_i32 = arith.constant 0 : i32
    %c0_i32_0 = arith.constant 0 : i32
    %c0_i32_1 = arith.constant 0 : i32
    return %c0_i32, %c0_i32_0 : i32, i32
  }
  func.func @transform_4(%arg0: i32, %arg1: memref<8x2xi32, #tpu.memory_space<smem>>) -> (i32, i32) {
    %c0_i32 = arith.constant 0 : i32
    %c0_i32_0 = arith.constant 0 : i32
    %c0_i32_1 = arith.constant 0 : i32
    return %c0_i32, %c0_i32_0 : i32, i32
  }
  func.func @transform_5(%arg0: i32, %arg1: memref<8x2xi32, #tpu.memory_space<smem>>) -> (i32, i32) {
    %c0_i32 = arith.constant 0 : i32
    %c0_i32_0 = arith.constant 0 : i32
    %c0_i32_1 = arith.constant 0 : i32
    return %c0_i32, %c0_i32_0 : i32, i32
  }
  func.func @transform_6(%arg0: i32, %arg1: memref<8x2xi32, #tpu.memory_space<smem>>) -> (i32, i32) {
    %c0_i32 = arith.constant 0 : i32
    %c0_i32_0 = arith.constant 0 : i32
    %c0_i32_1 = arith.constant 0 : i32
    return %c0_i32, %c0_i32_0 : i32, i32
  }
  func.func @transform_7(%arg0: i32, %arg1: memref<8x2xi32, #tpu.memory_space<smem>>) -> (i32, i32) {
    %c0_i32 = arith.constant 0 : i32
    %c0_i32_0 = arith.constant 0 : i32
    %c0_i32_1 = arith.constant 0 : i32
    return %c0_i32, %c0_i32_0 : i32, i32
  }
  func.func @transform_8(%arg0: i32, %arg1: memref<8x2xi32, #tpu.memory_space<smem>>) -> (i32, i32) {
    %c0_i32 = arith.constant 0 : i32
    %c0_i32_0 = arith.constant 0 : i32
    %c0_i32_1 = arith.constant 0 : i32
    return %c0_i32, %c0_i32_0 : i32, i32
  }
  func.func @transform_9(%arg0: i32, %arg1: memref<8x2xi32, #tpu.memory_space<smem>>) -> (i32, i32, i32) {
    %c0_i32 = arith.constant 0 : i32
    %c0_i32_0 = arith.constant 0 : i32
    %c0_i32_1 = arith.constant 0 : i32
    %c0_i32_2 = arith.constant 0 : i32
    return %c0_i32, %c0_i32_0, %c0_i32_1 : i32, i32, i32
  }
  func.func @transform_10(%arg0: i32, %arg1: memref<8x2xi32, #tpu.memory_space<smem>>) -> (i32, i32) {
    %c0_i32 = arith.constant 0 : i32
    %c0_i32_0 = arith.constant 0 : i32
    %c0_i32_1 = arith.constant 0 : i32
    return %c0_i32, %c0_i32_0 : i32, i32
  }
  func.func @transform_11(%arg0: i32, %arg1: memref<8x2xi32, #tpu.memory_space<smem>>) -> (i32, i32) {
    %c0_i32 = arith.constant 0 : i32
    %c0_i32_0 = arith.constant 0 : i32
    %c0_i32_1 = arith.constant 0 : i32
    return %c0_i32, %c0_i32_0 : i32, i32
  }
  func.func @transform_12(%arg0: i32, %arg1: memref<8x2xi32, #tpu.memory_space<smem>>) -> (i32, i32) {
    %c0_i32 = arith.constant 0 : i32
    %c0_i32_0 = arith.constant 0 : i32
    %c0_i32_1 = arith.constant 0 : i32
    return %c0_i32, %c0_i32_0 : i32, i32
  }
  func.func @transform_13(%arg0: i32, %arg1: memref<8x2xi32, #tpu.memory_space<smem>>) -> (i32, i32) {
    %c0_i32 = arith.constant 0 : i32
    %c0_i32_0 = arith.constant 0 : i32
    %c0_i32_1 = arith.constant 0 : i32
    return %c0_i32, %c0_i32_0 : i32, i32
  }
}

</mosaic_0001>

<llo_original>
// kernel: tpu_custom_call.1
$region0: #{tpu_custom_call.1}
  #allocation0 [shape = 'u32[]', space=smem, size = 0x4, offset = 0x4, fixed_abs, tag = 'smem constant byte address 0x4 - core index']
  #allocation1 [shape = 'u32[72,128]{1,0:T(1,128)}', space=vmem, size = 0x9000, scoped, tag = 'internal scratch']
  #allocation2 [shape = 's32[1]{0}', space=sflag, size = 0x4, scoped, tag = 'scoped memory for tpu_custom_call.1']
  #allocation3 [shape = 'u8[4096]{0}', space=smem, size = 0x1000, scoped, tag = 'prefetched SMEM operand 0']
  %s0 = inlined_call_operand.vmem [shape: s32[8,2], index: 0, kind: input, shape index: {}]
  %s1 = inlined_call_operand.hbm [shape: f32[20,1,32], index: 1, kind: input, shape index: {}]
  %s2 = inlined_call_operand.hbm [shape: bf16[64,128], index: 2, kind: input, shape index: {}]
  %s3 = inlined_call_operand.vmem [shape: f32[1,128], index: 3, kind: input, shape index: {}]
  %s4 = inlined_call_operand.hbm [shape: bf16[64,128], index: 4, kind: input, shape index: {}]
  %s5 = inlined_call_operand.vmem [shape: f32[1,128], index: 5, kind: input, shape index: {}]
  %s6 = inlined_call_operand.vmem [shape: f32[2,32], index: 6, kind: input, shape index: {}]
  %s7 = inlined_call_operand.vmem [shape: f32[2,32], index: 7, kind: input, shape index: {}]
  %s8 = inlined_call_operand.vmem [shape: f32[2,32], index: 8, kind: input, shape index: {}]
  %s9 = inlined_call_operand.vmem [shape: f32[2,32], index: 9, kind: input, shape index: {}]
  %s10 = inlined_call_operand.hbm [shape: f32[8,2,32], index: 10, kind: output, shape index: {0}]
  %s11 = inlined_call_operand.hbm [shape: f32[2,32], index: 11, kind: output, shape index: {1}]
  %s12 = inlined_call_operand.hbm [shape: f32[2,32], index: 12, kind: output, shape index: {2}]
  %s13 = inlined_call_operand.hbm [shape: f32[2,32], index: 13, kind: output, shape index: {3}]
  %s14 = inlined_call_operand.hbm [shape: f32[2,32], index: 14, kind: output, shape index: {4}]
  %15 = xla_tuple %s10, %s11, %s12, %s13, %s14
  %s16 = sld [smem:[#allocation0]]
  $region90: #{tpu_custom_call.1} parent=0
    _
  %s18 = ssub.s32 1, %s16
  %s19 = scalar_select 0, %s18, %s16
  %s21 = sshll.u32 %s0, 4
  %s22 = int_to_ptr.vmem [resolvable:$true] %s21
  %24 = dma.vmem_to_smem %s22, 128, [#allocation3], [#allocation2]
  %26 = dma.done [#allocation2], 128
  %27 = sfence
  $region1: #{tpu_custom_call.1} parent=0
    #allocation4 [shape = 'u8[10240]{0}', space=vmem, size = 0x2800, scoped, tag = 'input window, operand 1, single buffered']
    #allocation5 [shape = 's32[1]{0}', space=sflag, size = 0x4, scoped, tag = 'scoped memory for tpu_custom_call.1']
    #allocation6 [shape = 's32[1]{0}', space=sflag, size = 0x4, scoped, tag = 'scoped memory for tpu_custom_call.1']
    #allocation7 [shape = 'u8[16384]{0}', space=vmem, size = 0x4000, scoped, tag = 'input window, operand 2, single buffered']
    #allocation8 [shape = 's32[1]{0}', space=sflag, size = 0x4, scoped, tag = 'scoped memory for tpu_custom_call.1']
    #allocation9 [shape = 'u8[16384]{0}', space=vmem, size = 0x4000, scoped, tag = 'input window, operand 4, single buffered']
    #allocation10 [shape = 'u8[8192]{0}', space=vmem, size = 0x2000, scoped, tag = 'output window, operand 0, single buffered']
    #allocation11 [shape = 'u8[1024]{0}', space=vmem, size = 0x400, scoped, tag = 'output window, operand 1, single buffered']
    #allocation12 [shape = 's32[1]{0}', space=sflag, size = 0x4, scoped, tag = 'scoped memory for tpu_custom_call.1']
    #allocation13 [shape = 'u8[1024]{0}', space=vmem, size = 0x400, scoped, tag = 'output window, operand 2, single buffered']
    #allocation14 [shape = 'u8[1024]{0}', space=vmem, size = 0x400, scoped, tag = 'output window, operand 3, single buffered']
    #allocation15 [shape = 's32[1]{0}', space=sflag, size = 0x4, scoped, tag = 'scoped memory for tpu_custom_call.1']
    #allocation16 [shape = 'u8[1024]{0}', space=vmem, size = 0x400, scoped, tag = 'output window, operand 4, single buffered']
    %28 = vsyncpa [#allocation5], 0
    %29 = vsyncpa [#allocation8], 0
    %30 = vsyncpa [#allocation6], 0
    %31 = vsyncpa [#allocation12], 0
    %32 = vsyncpa [#allocation15], 0
    // Predicated region
    $region2: #{tpu_custom_call.1} parent=1 // pred_check
      _
    $region3: #{tpu_custom_call.1} parent=1 // pred_check_branch
      %34 = sbr.rel (0) target = $region5
    $region4: #{tpu_custom_call.1} parent=1 // pred_region
      %36 = vsyncadd [#allocation5], 0
      %s37 = sshll.u32 %s1, 4
      %s38 = int_to_ptr.hbm [resolvable:$true] %s37
      %s39 = sshll.u32 [#allocation4], 4
      %s40 = int_to_ptr.vmem [resolvable:$true] %s39
      %45 = dma.hbm_to_vmem [thread:$0]  %s38, 320, %s40, [#allocation5], 16, 16, 1
    $region5: #{tpu_custom_call.1} parent=1 // pred_fallthru
      _
    // Predicated region
    $region6: #{tpu_custom_call.1} parent=1 // pred_check
      _
    $region7: #{tpu_custom_call.1} parent=1 // pred_check_branch
      %47 = sbr.rel (0) target = $region9
    $region8: #{tpu_custom_call.1} parent=1 // pred_region
      %49 = vsyncadd [#allocation8], 0
      %s50 = sshll.u32 %s2, 4
      %s51 = int_to_ptr.hbm [resolvable:$true] %s50
      %s52 = sshll.u32 [#allocation7], 4
      %s53 = int_to_ptr.vmem [resolvable:$true] %s52
      %58 = dma.hbm_to_vmem [thread:$0]  %s51, 512, %s53, [#allocation8], 64, 64, 4
    $region9: #{tpu_custom_call.1} parent=1 // pred_fallthru
      _
    // Predicated region
    $region10: #{tpu_custom_call.1} parent=1 // pred_check
      _
    $region11: #{tpu_custom_call.1} parent=1 // pred_check_branch
      %60 = sbr.rel (0) target = $region13
    $region12: #{tpu_custom_call.1} parent=1 // pred_region
      _
    $region13: #{tpu_custom_call.1} parent=1 // pred_fallthru
      _
    // Predicated region
    $region14: #{tpu_custom_call.1} parent=1 // pred_check
      _
    $region15: #{tpu_custom_call.1} parent=1 // pred_check_branch
      %62 = sbr.rel (0) target = $region17
    $region16: #{tpu_custom_call.1} parent=1 // pred_region
      %64 = vsyncadd [#allocation8], 0
      %s65 = sshll.u32 %s4, 4
      %s66 = int_to_ptr.hbm [resolvable:$true] %s65
      %s67 = sshll.u32 [#allocation9], 4
      %s68 = int_to_ptr.vmem [resolvable:$true] %s67
      %73 = dma.hbm_to_vmem [thread:$0]  %s66, 512, %s68, [#allocation8], 64, 64, 4
    $region17: #{tpu_custom_call.1} parent=1 // pred_fallthru
      _
    // Predicated region
    $region18: #{tpu_custom_call.1} parent=1 // pred_check
      _
    $region19: #{tpu_custom_call.1} parent=1 // pred_check_branch
      %75 = sbr.rel (0) target = $region21
    $region20: #{tpu_custom_call.1} parent=1 // pred_region
      _
    $region21: #{tpu_custom_call.1} parent=1 // pred_fallthru
      _
    // Predicated region
    $region22: #{tpu_custom_call.1} parent=1 // pred_check
      _
    $region23: #{tpu_custom_call.1} parent=1 // pred_check_branch
      %77 = sbr.rel (0) target = $region25
    $region24: #{tpu_custom_call.1} parent=1 // pred_region
      _
    $region25: #{tpu_custom_call.1} parent=1 // pred_fallthru
      _
    // Predicated region
    $region26: #{tpu_custom_call.1} parent=1 // pred_check
      _
    $region27: #{tpu_custom_call.1} parent=1 // pred_check_branch
      %79 = sbr.rel (0) target = $region29
    $region28: #{tpu_custom_call.1} parent=1 // pred_region
      _
    $region29: #{tpu_custom_call.1} parent=1 // pred_fallthru
      _
    // Predicated region
    $region30: #{tpu_custom_call.1} parent=1 // pred_check
      _
    $region31: #{tpu_custom_call.1} parent=1 // pred_check_branch
      %81 = sbr.rel (0) target = $region33
    $region32: #{tpu_custom_call.1} parent=1 // pred_region
      _
    $region33: #{tpu_custom_call.1} parent=1 // pred_fallthru
      _
    // Predicated region
    $region34: #{tpu_custom_call.1} parent=1 // pred_check
      _
    $region35: #{tpu_custom_call.1} parent=1 // pred_check_branch
      %83 = sbr.rel (0) target = $region37
    $region36: #{tpu_custom_call.1} parent=1 // pred_region
      _
    $region37: #{tpu_custom_call.1} parent=1 // pred_fallthru
      _
    // Predicated region
    $region38: #{tpu_custom_call.1} parent=1 // pred_check
      _
    $region39: #{tpu_custom_call.1} parent=1 // pred_check_branch
      %85 = sbr.rel (0) target = $region41
    $region40: #{tpu_custom_call.1} parent=1 // pred_region
      %87 = dma.done [#allocation5], 320
    $region41: #{tpu_custom_call.1} parent=1 // pred_fallthru
      _
    // Predicated region
    $region42: #{tpu_custom_call.1} parent=1 // pred_check
      _
    $region43: #{tpu_custom_call.1} parent=1 // pred_check_branch
      %89 = sbr.rel (0) target = $region45
    $region44: #{tpu_custom_call.1} parent=1 // pred_region
      %91 = dma.done [#allocation8], 512
    $region45: #{tpu_custom_call.1} parent=1 // pred_fallthru
      _
    // Predicated region
    $region46: #{tpu_custom_call.1} parent=1 // pred_check
      _
    $region47: #{tpu_custom_call.1} parent=1 // pred_check_branch
      %93 = sbr.rel (0) target = $region49
    $region48: #{tpu_custom_call.1} parent=1 // pred_region
      %95 = dma.done [#allocation8], 512
    $region49: #{tpu_custom_call.1} parent=1 // pred_fallthru
      _
    %v97 = vld [vmem:[#allocation7] sm:$0xf]
    %v98 = vld [vmem:[#allocation7 + $0x4] sm:$0xf]
    %v99 = vld [vmem:[#allocation7 + $0x8] sm:$0xf]
    %v100 = vld [vmem:[#allocation7 + $0xc] sm:$0xf]
    %v101 = vld [vmem:[#allocation7 + $0x10] sm:$0xf]
    %v102 = vld [vmem:[#allocation7 + $0x14] sm:$0xf]
    %v103 = vld [vmem:[#allocation7 + $0x18] sm:$0xf]
    %v104 = vld [vmem:[#allocation7 + $0x1c] sm:$0xf]
    %v105 = vld [vmem:[#allocation9] sm:$0xf]
    %v106 = vld [vmem:[#allocation9 + $0x4] sm:$0xf]
    %v107 = vld [vmem:[#allocation9 + $0x8] sm:$0xf]
    %v108 = vld [vmem:[#allocation9 + $0xc] sm:$0xf]
    %v109 = vld [vmem:[#allocation9 + $0x10] sm:$0xf]
    %v110 = vld [vmem:[#allocation9 + $0x14] sm:$0xf]
    %v111 = vld [vmem:[#allocation9 + $0x18] sm:$0xf]
    %v112 = vld [vmem:[#allocation9 + $0x1c] sm:$0xf]
    %v113 = vld [vmem:[%s3] sm:$0x1]
    %v115 = vperm.slane %v113, 0
    %v117 = vld [vmem:[%s5] sm:$0x1]
    %v119 = vperm.slane %v117, 0
    %v121 = vld [vmem:[%s6] sm:$0x3]
    %v122 = vld [vmem:[%s8] sm:$0x3]
    %v123 = vld [vmem:[%s7] sm:$0x3]
    %v124 = vld [vmem:[%s9] sm:$0x3]
    %s125 = sld [smem:[#allocation3]]
    %s126 = scalar_lea.vmem [#allocation4], %s125
    %v127 = vld [vmem:[%s126] sm:$0x1]
    %s128 = sld [smem:[#allocation3 + $0x1]]
    %s129 = scalar_lea.vmem [#allocation4], %s128
    %v130 = vld [vmem:[%s129] sm:$0x1]
    %v132 = vperm.slane %v130, 0
    %vm134 = vcmask 1040384
    %v135 = vsel %vm134, %v127, %v132
    %137 = vrot.lane.b32.xlu0 %v121, 32
    %v138 = vpop.permute.xlu0 %137
    %vm140 = vcmask 261120
    %v141 = vsel %vm140, %v135, %v138
    %v142 = vpack.c.bf16 %v141, %v141
    %v151 = vunpack.c.l.b16 %v97
    %v152 = vunpack.c.l.b16 %v98
    %v153 = vunpack.c.l.b16 %v99
    %v154 = vunpack.c.l.b16 %v100
    %v155 = vunpack.c.l.b16 %v101
    %v156 = vunpack.c.l.b16 %v102
    %v157 = vunpack.c.l.b16 %v103
    %v158 = vunpack.c.l.b16 %v104
    %v159 = vpack.c.b16 %v152, %v151
    %v160 = vpack.c.b16 %v154, %v153
    %v161 = vpack.c.b16 %v156, %v155
    %v162 = vpack.c.b16 %v158, %v157
    %vm167 = vcmask 523264
    %v169 = vsel %vm167, %v142, 0
    %171 = vmatpush.bf16.msra.mxu0 0
    %172 = vmatpush.bf16.msra.mxu0 0
    %173 = vmatpush.bf16.msra.mxu0 0
    %174 = vmatpush.bf16.msra.mxu0 0
    %175 = vmatpush.bf16.msra.mxu0 %v162
    %176 = vmatpush.bf16.msra.mxu0 %v161
    %177 = vmatpush.bf16.msra.mxu0 %v160
    %178 = vmatpush.bf16.msra.mxu0 %v159
    %179 = vmatmul.bf16.gmra.mxu0 %v169
    %v180 = vpop.f32.mrf.mxu0
    %v181 = vadd.f32 %v115, %v180
    %v182 = vpop.f32.mrf.mxu0
    %183 = vdwg.mxu0
    %v184 = vxor.u32 %v181, 2147483648
    %v185 = vmul.f32 %v184, 1.442695
    %v186 = vpow.pop %v185
    %v187 = vadd.f32 %v186, 1.0
    %v188 = vrcp.pop %v187
    %v189 = vmul.f32 %v187, %v188
    %v190 = vsub.f32 1.0, %v189
    %v191 = vmul.f32 %v188, %v190
    %v192 = vadd.f32 %v188, %v191
    %vm193 = vweird.f32 %v187
    %vm194 = vweird.f32 %v188
    %vm195 = vmor %vm193, %vm194
    %v196 = vsel %vm195, %v188, %v192
    %v197 = vand.u32 2147483647, %v187
    %vm198 = vcmp.eq.f32.partialorder %v197, 8.507059e+37
    %v199 = vand.u32 %v187, 2147483648
    %v200 = vor.u32 1.1754944e-38, %v199
    %v201 = vsel %vm198, %v200, %v196
    %v202 = vmul.f32 1.0, %v201
    %v203 = vtanh.pop %v181
    %205 = vrot.lane.b32.xlu0 %v123, 32
    %v206 = vpop.permute.xlu0 %205
    %v208 = vmul.f32 %v202, %v206
    %210 = vrot.lane.b32.xlu0 %v203, 64
    %v211 = vpop.permute.xlu0 %210
    %v213 = vmul.f32 %v202, %v211
    %215 = vrot.lane.b32.xlu0 %v213, 32
    %v216 = vpop.permute.xlu0 %215
    %v218 = vadd.f32 %v208, %v216
    %v219 = vtanh.pop %v218
    %221 = vrot.lane.b32.xlu0 %v219, 64
    %v222 = vpop.permute.xlu0 %221
    %v224 = vmul.f32 %v202, %v222
    %226 = vrot.lane.b32.xlu0 %v224, 32
    %v227 = vpop.permute.xlu0 %226
    %230 = vrot.lane.b32.xlu0 %v122, 32
    %v231 = vpop.permute.xlu0 %230
    %v233 = vsel %vm140, %v227, %v231
    %v234 = vpack.c.bf16 %v233, %v233
    %v243 = vunpack.c.l.b16 %v105
    %v244 = vunpack.c.l.b16 %v106
    %v245 = vunpack.c.l.b16 %v107
    %v246 = vunpack.c.l.b16 %v108
    %v247 = vunpack.c.l.b16 %v109
    %v248 = vunpack.c.l.b16 %v110
    %v249 = vunpack.c.l.b16 %v111
    %v250 = vunpack.c.l.b16 %v112
    %v251 = vpack.c.b16 %v244, %v243
    %v252 = vpack.c.b16 %v246, %v245
    %v253 = vpack.c.b16 %v248, %v247
    %v254 = vpack.c.b16 %v250, %v249
    %v260 = vsel %vm167, %v234, 0
    %262 = vmatpush.bf16.msra.mxu0 0
    %263 = vmatpush.bf16.msra.mxu0 0
    %264 = vmatpush.bf16.msra.mxu0 0
    %265 = vmatpush.bf16.msra.mxu0 0
    %266 = vmatpush.bf16.msra.mxu0 %v254
    %267 = vmatpush.bf16.msra.mxu0 %v253
    %268 = vmatpush.bf16.msra.mxu0 %v252
    %269 = vmatpush.bf16.msra.mxu0 %v251
    %270 = vmatmul.bf16.gmra.mxu0 %v260
    %v271 = vpop.f32.mrf.mxu0
    %v272 = vadd.f32 %v119, %v271
    %v273 = vpop.f32.mrf.mxu0
    %274 = vdwg.mxu0
    %v275 = vxor.u32 %v272, 2147483648
    %v276 = vmul.f32 %v275, 1.442695
    %v277 = vpow.pop %v276
    %v278 = vadd.f32 %v277, 1.0
    %v279 = vrcp.pop %v278
    %v280 = vmul.f32 %v278, %v279
    %v281 = vsub.f32 1.0, %v280
    %v282 = vmul.f32 %v279, %v281
    %v283 = vadd.f32 %v279, %v282
    %vm284 = vweird.f32 %v278
    %vm285 = vweird.f32 %v279
    %vm286 = vmor %vm284, %vm285
    %v287 = vsel %vm286, %v279, %v283
    %v288 = vand.u32 2147483647, %v278
    %vm289 = vcmp.eq.f32.partialorder %v288, 8.507059e+37
    %v290 = vand.u32 %v278, 2147483648
    %v291 = vor.u32 1.1754944e-38, %v290
    %v292 = vsel %vm289, %v291, %v287
    %v293 = vmul.f32 1.0, %v292
    %v294 = vtanh.pop %v272
    %296 = vrot.lane.b32.xlu0 %v124, 32
    %v297 = vpop.permute.xlu0 %296
    %v299 = vmul.f32 %v293, %v297
    %301 = vrot.lane.b32.xlu0 %v294, 64
    %v302 = vpop.permute.xlu0 %301
    %v304 = vmul.f32 %v293, %v302
    %306 = vrot.lane.b32.xlu0 %v304, 32
    %v307 = vpop.permute.xlu0 %306
    %v309 = vadd.f32 %v299, %v307
    %v310 = vtanh.pop %v309
    %312 = vrot.lane.b32.xlu0 %v310, 64
    %v313 = vpop.permute.xlu0 %312
    %v315 = vmul.f32 %v293, %v313
    %317 = vrot.lane.b32.xlu0 %v315, 32
    %v318 = vpop.permute.xlu0 %317
    %vm320 = vcmask 254976
    %321 = vst.msk [vmem:[#allocation10] sm:$0x3] %vm320, %v318
    %s322 = sld [smem:[#allocation3 + $0x80]]
    %s323 = scalar_lea.vmem [#allocation4], %s322
    %v324 = vld [vmem:[%s323] sm:$0x1]
    %s325 = sld [smem:[#allocation3 + $0x81]]
    %s326 = scalar_lea.vmem [#allocation4], %s325
    %v327 = vld [vmem:[%s326] sm:$0x1]
    %v329 = vperm.slane %v327, 0
    %v331 = vsel %vm134, %v324, %v329
    %332 = vrot.lane.b32.xlu0 %v224, 64
    %v333 = vpop.permute.xlu0 %332
    %v335 = vsel %vm140, %v331, %v333
    %v336 = vpack.c.bf16 %v335, %v335
    %v338 = vsel %vm167, %v336, 0
    %340 = vmatpush.bf16.msra.mxu0 0
    %341 = vmatpush.bf16.msra.mxu0 0
    %342 = vmatpush.bf16.msra.mxu0 0
    %343 = vmatpush.bf16.msra.mxu0 0
    %344 = vmatpush.bf16.msra.mxu0 %v162
    %345 = vmatpush.bf16.msra.mxu0 %v161
    %346 = vmatpush.bf16.msra.mxu0 %v160
    %347 = vmatpush.bf16.msra.mxu0 %v159
    %348 = vmatmul.bf16.gmra.mxu0 %v338
    %v349 = vpop.f32.mrf.mxu0
    %v350 = vadd.f32 %v115, %v349
    %v351 = vpop.f32.mrf.mxu0
    %352 = vdwg.mxu0
    %v353 = vxor.u32 %v350, 2147483648
    %v354 = vmul.f32 %v353, 1.442695
    %v355 = vpow.pop %v354
    %v356 = vadd.f32 %v355, 1.0
    %v357 = vrcp.pop %v356
    %v358 = vmul.f32 %v356, %v357
    %v359 = vsub.f32 1.0, %v358
    %v360 = vmul.f32 %v357, %v359
    %v361 = vadd.f32 %v357, %v360
    %vm362 = vweird.f32 %v356
    %vm363 = vweird.f32 %v357
    %vm364 = vmor %vm362, %vm363
    %v365 = vsel %vm364, %v357, %v361
    %v366 = vand.u32 2147483647, %v356
    %vm367 = vcmp.eq.f32.partialorder %v366, 8.507059e+37
    %v368 = vand.u32 %v356, 2147483648
    %v369 = vor.u32 1.1754944e-38, %v368
    %v370 = vsel %vm367, %v369, %v365
    %v371 = vmul.f32 1.0, %v370
    %v372 = vtanh.pop %v350
    %v373 = vmul.f32 %v371, %v218
    %375 = vrot.lane.b32.xlu0 %v372, 64
    %v376 = vpop.permute.xlu0 %375
    %v378 = vmul.f32 %v371, %v376
    %380 = vrot.lane.b32.xlu0 %v378, 32
    %v381 = vpop.permute.xlu0 %380
    %v383 = vadd.f32 %v373, %v381
    %v384 = vtanh.pop %v383
    %386 = vrot.lane.b32.xlu0 %v384, 64
    %v387 = vpop.permute.xlu0 %386
    %v389 = vmul.f32 %v371, %v387
    %391 = vrot.lane.b32.xlu0 %v389, 32
    %v392 = vpop.permute.xlu0 %391
    %394 = vrot.lane.b32.xlu0 %v315, 64
    %v395 = vpop.permute.xlu0 %394
    %v397 = vsel %vm140, %v392, %v395
    %v398 = vpack.c.bf16 %v397, %v397
    %v400 = vsel %vm167, %v398, 0
    %402 = vmatpush.bf16.msra.mxu0 0
    %403 = vmatpush.bf16.msra.mxu0 0
    %404 = vmatpush.bf16.msra.mxu0 0
    %405 = vmatpush.bf16.msra.mxu0 0
    %406 = vmatpush.bf16.msra.mxu0 %v254
    %407 = vmatpush.bf16.msra.mxu0 %v253
    %408 = vmatpush.bf16.msra.mxu0 %v252
    %409 = vmatpush.bf16.msra.mxu0 %v251
    %410 = vmatmul.bf16.gmra.mxu0 %v400
    %v411 = vpop.f32.mrf.mxu0
    %v412 = vadd.f32 %v119, %v411
    %v413 = vpop.f32.mrf.mxu0
    %414 = vdwg.mxu0
    %v415 = vxor.u32 %v412, 2147483648
    %v416 = vmul.f32 %v415, 1.442695
    %v417 = vpow.pop %v416
    %v418 = vadd.f32 %v417, 1.0
    %v419 = vrcp.pop %v418
    %v420 = vmul.f32 %v418, %v419
    %v421 = vsub.f32 1.0, %v420
    %v422 = vmul.f32 %v419, %v421
    %v423 = vadd.f32 %v419, %v422
    %vm424 = vweird.f32 %v418
    %vm425 = vweird.f32 %v419
    %vm426 = vmor %vm424, %vm425
    %v427 = vsel %vm426, %v419, %v423
    %v428 = vand.u32 2147483647, %v418
    %vm429 = vcmp.eq.f32.partialorder %v428, 8.507059e+37
    %v430 = vand.u32 %v418, 2147483648
    %v431 = vor.u32 1.1754944e-38, %v430
    %v432 = vsel %vm429, %v431, %v427
    %v433 = vmul.f32 1.0, %v432
    %v434 = vtanh.pop %v412
    %v435 = vmul.f32 %v433, %v309
    %437 = vrot.lane.b32.xlu0 %v434, 64
    %v438 = vpop.permute.xlu0 %437
    %v440 = vmul.f32 %v433, %v438
    %442 = vrot.lane.b32.xlu0 %v440, 32
    %v443 = vpop.permute.xlu0 %442
    %v445 = vadd.f32 %v435, %v443
    %v446 = vtanh.pop %v445
    %448 = vrot.lane.b32.xlu0 %v446, 64
    %v449 = vpop.permute.xlu0 %448
    %v451 = vmul.f32 %v433, %v449
    %453 = vrot.lane.b32.xlu0 %v451, 32
    %v454 = vpop.permute.xlu0 %453
    %s456 = scalar_lea.vmem [#allocation10], 2
    %457 = vst.msk [vmem:[%s456] sm:$0x3] %vm320, %v454
    %s458 = sld [smem:[#allocation3 + $0x100]]
    %s459 = scalar_lea.vmem [#allocation4], %s458
    %v460 = vld [vmem:[%s459] sm:$0x1]
    %s461 = sld [smem:[#allocation3 + $0x101]]
    %s462 = scalar_lea.vmem [#allocation4], %s461
    %v463 = vld [vmem:[%s462] sm:$0x1]
    %v465 = vperm.slane %v463, 0
    %v467 = vsel %vm134, %v460, %v465
    %468 = vrot.lane.b32.xlu0 %v389, 64
    %v469 = vpop.permute.xlu0 %468
    %v471 = vsel %vm140, %v467, %v469
    %v472 = vpack.c.bf16 %v471, %v471
    %v474 = vsel %vm167, %v472, 0
    %476 = vmatpush.bf16.msra.mxu0 0
    %477 = vmatpush.bf16.msra.mxu0 0
    %478 = vmatpush.bf16.msra.mxu0 0
    %479 = vmatpush.bf16.msra.mxu0 0
    %480 = vmatpush.bf16.msra.mxu0 %v162
    %481 = vmatpush.bf16.msra.mxu0 %v161
    %482 = vmatpush.bf16.msra.mxu0 %v160
    %483 = vmatpush.bf16.msra.mxu0 %v159
    %484 = vmatmul.bf16.gmra.mxu0 %v474
    %v485 = vpop.f32.mrf.mxu0
    %v486 = vadd.f32 %v115, %v485
    %v487 = vpop.f32.mrf.mxu0
    %488 = vdwg.mxu0
    %v489 = vxor.u32 %v486, 2147483648
    %v490 = vmul.f32 %v489, 1.442695
    %v491 = vpow.pop %v490
    %v492 = vadd.f32 %v491, 1.0
    %v493 = vrcp.pop %v492
    %v494 = vmul.f32 %v492, %v493
    %v495 = vsub.f32 1.0, %v494
    %v496 = vmul.f32 %v493, %v495
    %v497 = vadd.f32 %v493, %v496
    %vm498 = vweird.f32 %v492
    %vm499 = vweird.f32 %v493
    %vm500 = vmor %vm498, %vm499
    %v501 = vsel %vm500, %v493, %v497
    %v502 = vand.u32 2147483647, %v492
    %vm503 = vcmp.eq.f32.partialorder %v502, 8.507059e+37
    %v504 = vand.u32 %v492, 2147483648
    %v505 = vor.u32 1.1754944e-38, %v504
    %v506 = vsel %vm503, %v505, %v501
    %v507 = vmul.f32 1.0, %v506
    %v508 = vtanh.pop %v486
    %v509 = vmul.f32 %v507, %v383
    %511 = vrot.lane.b32.xlu0 %v508, 64
    %v512 = vpop.permute.xlu0 %511
    %v514 = vmul.f32 %v507, %v512
    %516 = vrot.lane.b32.xlu0 %v514, 32
    %v517 = vpop.permute.xlu0 %516
    %v519 = vadd.f32 %v509, %v517
    %v520 = vtanh.pop %v519
    %522 = vrot.lane.b32.xlu0 %v520, 64
    %v523 = vpop.permute.xlu0 %522
    %v525 = vmul.f32 %v507, %v523
    %527 = vrot.lane.b32.xlu0 %v525, 32
    %v528 = vpop.permute.xlu0 %527
    %530 = vrot.lane.b32.xlu0 %v451, 64
    %v531 = vpop.permute.xlu0 %530
    %v533 = vsel %vm140, %v528, %v531
    %v534 = vpack.c.bf16 %v533, %v533
    %v536 = vsel %vm167, %v534, 0
    %538 = vmatpush.bf16.msra.mxu0 0
    %539 = vmatpush.bf16.msra.mxu0 0
    %540 = vmatpush.bf16.msra.mxu0 0
    %541 = vmatpush.bf16.msra.mxu0 0
    %542 = vmatpush.bf16.msra.mxu0 %v254
    %543 = vmatpush.bf16.msra.mxu0 %v253
    %544 = vmatpush.bf16.msra.mxu0 %v252
    %545 = vmatpush.bf16.msra.mxu0 %v251
    %546 = vmatmul.bf16.gmra.mxu0 %v536
    %v547 = vpop.f32.mrf.mxu0
    %v548 = vadd.f32 %v119, %v547
    %v549 = vpop.f32.mrf.mxu0
    %550 = vdwg.mxu0
    %v551 = vxor.u32 %v548, 2147483648
    %v552 = vmul.f32 %v551, 1.442695
    %v553 = vpow.pop %v552
    %v554 = vadd.f32 %v553, 1.0
    %v555 = vrcp.pop %v554
    %v556 = vmul.f32 %v554, %v555
    %v557 = vsub.f32 1.0, %v556
    %v558 = vmul.f32 %v555, %v557
    %v559 = vadd.f32 %v555, %v558
    %vm560 = vweird.f32 %v554
    %vm561 = vweird.f32 %v555
    %vm562 = vmor %vm560, %vm561
    %v563 = vsel %vm562, %v555, %v559
    %v564 = vand.u32 2147483647, %v554
    %vm565 = vcmp.eq.f32.partialorder %v564, 8.507059e+37
    %v566 = vand.u32 %v554, 2147483648
    %v567 = vor.u32 1.1754944e-38, %v566
    %v568 = vsel %vm565, %v567, %v563
    %v569 = vmul.f32 1.0, %v568
    %v570 = vtanh.pop %v548
    %v571 = vmul.f32 %v569, %v445
    %573 = vrot.lane.b32.xlu0 %v570, 64
    %v574 = vpop.permute.xlu0 %573
    %v576 = vmul.f32 %v569, %v574
    %578 = vrot.lane.b32.xlu0 %v576, 32
    %v579 = vpop.permute.xlu0 %578
    %v581 = vadd.f32 %v571, %v579
    %v582 = vtanh.pop %v581
    %584 = vrot.lane.b32.xlu0 %v582, 64
    %v585 = vpop.permute.xlu0 %584
    %v587 = vmul.f32 %v569, %v585
    %589 = vrot.lane.b32.xlu0 %v587, 32
    %v590 = vpop.permute.xlu0 %589
    %s592 = scalar_lea.vmem [#allocation10], 4
    %593 = vst.msk [vmem:[%s592] sm:$0x3] %vm320, %v590
    %s594 = sld [smem:[#allocation3 + $0x180]]
    %s595 = scalar_lea.vmem [#allocation4], %s594
    %v596 = vld [vmem:[%s595] sm:$0x1]
    %s597 = sld [smem:[#allocation3 + $0x181]]
    %s598 = scalar_lea.vmem [#allocation4], %s597
    %v599 = vld [vmem:[%s598] sm:$0x1]
    %v601 = vperm.slane %v599, 0
    %v603 = vsel %vm134, %v596, %v601
    %604 = vrot.lane.b32.xlu0 %v525, 64
    %v605 = vpop.permute.xlu0 %604
    %v607 = vsel %vm140, %v603, %v605
    %v608 = vpack.c.bf16 %v607, %v607
    %v610 = vsel %vm167, %v608, 0
    %612 = vmatpush.bf16.msra.mxu0 0
    %613 = vmatpush.bf16.msra.mxu0 0
    %614 = vmatpush.bf16.msra.mxu0 0
    %615 = vmatpush.bf16.msra.mxu0 0
    %616 = vmatpush.bf16.msra.mxu0 %v162
    %617 = vmatpush.bf16.msra.mxu0 %v161
    %618 = vmatpush.bf16.msra.mxu0 %v160
    %619 = vmatpush.bf16.msra.mxu0 %v159
    %620 = vmatmul.bf16.gmra.mxu0 %v610
    %v621 = vpop.f32.mrf.mxu0
    %v622 = vadd.f32 %v115, %v621
    %v623 = vpop.f32.mrf.mxu0
    %624 = vdwg.mxu0
    %v625 = vxor.u32 %v622, 2147483648
    %v626 = vmul.f32 %v625, 1.442695
    %v627 = vpow.pop %v626
    %v628 = vadd.f32 %v627, 1.0
    %v629 = vrcp.pop %v628
    %v630 = vmul.f32 %v628, %v629
    %v631 = vsub.f32 1.0, %v630
    %v632 = vmul.f32 %v629, %v631
    %v633 = vadd.f32 %v629, %v632
    %vm634 = vweird.f32 %v628
    %vm635 = vweird.f32 %v629
    %vm636 = vmor %vm634, %vm635
    %v637 = vsel %vm636, %v629, %v633
    %v638 = vand.u32 2147483647, %v628
    %vm639 = vcmp.eq.f32.partialorder %v638, 8.507059e+37
    %v640 = vand.u32 %v628, 2147483648
    %v641 = vor.u32 1.1754944e-38, %v640
    %v642 = vsel %vm639, %v641, %v637
    %v643 = vmul.f32 1.0, %v642
    %v644 = vtanh.pop %v622
    %v645 = vmul.f32 %v643, %v519
    %647 = vrot.lane.b32.xlu0 %v644, 64
    %v648 = vpop.permute.xlu0 %647
    %v650 = vmul.f32 %v643, %v648
    %652 = vrot.lane.b32.xlu0 %v650, 32
    %v653 = vpop.permute.xlu0 %652
    %v655 = vadd.f32 %v645, %v653
    %v656 = vtanh.pop %v655
    %658 = vrot.lane.b32.xlu0 %v656, 64
    %v659 = vpop.permute.xlu0 %658
    %v661 = vmul.f32 %v643, %v659
    %663 = vrot.lane.b32.xlu0 %v661, 32
    %v664 = vpop.permute.xlu0 %663
    %666 = vrot.lane.b32.xlu0 %v587, 64
    %v667 = vpop.permute.xlu0 %666
    %v669 = vsel %vm140, %v664, %v667
    %v670 = vpack.c.bf16 %v669, %v669
    %v672 = vsel %vm167, %v670, 0
    %674 = vmatpush.bf16.msra.mxu0 0
    %675 = vmatpush.bf16.msra.mxu0 0
    %676 = vmatpush.bf16.msra.mxu0 0
    %677 = vmatpush.bf16.msra.mxu0 0
    %678 = vmatpush.bf16.msra.mxu0 %v254
    %679 = vmatpush.bf16.msra.mxu0 %v253
    %680 = vmatpush.bf16.msra.mxu0 %v252
    %681 = vmatpush.bf16.msra.mxu0 %v251
    %682 = vmatmul.bf16.gmra.mxu0 %v672
    %v683 = vpop.f32.mrf.mxu0
    %v684 = vadd.f32 %v119, %v683
    %v685 = vpop.f32.mrf.mxu0
    %686 = vdwg.mxu0
    %v687 = vxor.u32 %v684, 2147483648
    %v688 = vmul.f32 %v687, 1.442695
    %v689 = vpow.pop %v688
    %v690 = vadd.f32 %v689, 1.0
    %v691 = vrcp.pop %v690
    %v692 = vmul.f32 %v690, %v691
    %v693 = vsub.f32 1.0, %v692
    %v694 = vmul.f32 %v691, %v693
    %v695 = vadd.f32 %v691, %v694
    %vm696 = vweird.f32 %v690
    %vm697 = vweird.f32 %v691
    %vm698 = vmor %vm696, %vm697
    %v699 = vsel %vm698, %v691, %v695
    %v700 = vand.u32 2147483647, %v690
    %vm701 = vcmp.eq.f32.partialorder %v700, 8.507059e+37
    %v702 = vand.u32 %v690, 2147483648
    %v703 = vor.u32 1.1754944e-38, %v702
    %v704 = vsel %vm701, %v703, %v699
    %v705 = vmul.f32 1.0, %v704
    %v706 = vtanh.pop %v684
    %v707 = vmul.f32 %v705, %v581
    %709 = vrot.lane.b32.xlu0 %v706, 64
    %v710 = vpop.permute.xlu0 %709
    %v712 = vmul.f32 %v705, %v710
    %714 = vrot.lane.b32.xlu0 %v712, 32
    %v715 = vpop.permute.xlu0 %714
    %v717 = vadd.f32 %v707, %v715
    %v718 = vtanh.pop %v717
    %720 = vrot.lane.b32.xlu0 %v718, 64
    %v721 = vpop.permute.xlu0 %720
    %v723 = vmul.f32 %v705, %v721
    %725 = vrot.lane.b32.xlu0 %v723, 32
    %v726 = vpop.permute.xlu0 %725
    %s728 = scalar_lea.vmem [#allocation10], 6
    %729 = vst.msk [vmem:[%s728] sm:$0x3] %vm320, %v726
    %s730 = sld [smem:[#allocation3 + $0x200]]
    %s731 = scalar_lea.vmem [#allocation4], %s730
    %v732 = vld [vmem:[%s731] sm:$0x1]
    %s733 = sld [smem:[#allocation3 + $0x201]]
    %s734 = scalar_lea.vmem [#allocation4], %s733
    %v735 = vld [vmem:[%s734] sm:$0x1]
    %v737 = vperm.slane %v735, 0
    %v739 = vsel %vm134, %v732, %v737
    %740 = vrot.lane.b32.xlu0 %v661, 64
    %v741 = vpop.permute.xlu0 %740
    %v743 = vsel %vm140, %v739, %v741
    %v744 = vpack.c.bf16 %v743, %v743
    %v746 = vsel %vm167, %v744, 0
    %748 = vmatpush.bf16.msra.mxu0 0
    %749 = vmatpush.bf16.msra.mxu0 0
    %750 = vmatpush.bf16.msra.mxu0 0
    %751 = vmatpush.bf16.msra.mxu0 0
    %752 = vmatpush.bf16.msra.mxu0 %v162
    %753 = vmatpush.bf16.msra.mxu0 %v161
    %754 = vmatpush.bf16.msra.mxu0 %v160
    %755 = vmatpush.bf16.msra.mxu0 %v159
    %756 = vmatmul.bf16.gmra.mxu0 %v746
    %v757 = vpop.f32.mrf.mxu0
    %v758 = vadd.f32 %v115, %v757
    %v759 = vpop.f32.mrf.mxu0
    %760 = vdwg.mxu0
    %v761 = vxor.u32 %v758, 2147483648
    %v762 = vmul.f32 %v761, 1.442695
    %v763 = vpow.pop %v762
    %v764 = vadd.f32 %v763, 1.0
    %v765 = vrcp.pop %v764
    %v766 = vmul.f32 %v764, %v765
    %v767 = vsub.f32 1.0, %v766
    %v768 = vmul.f32 %v765, %v767
    %v769 = vadd.f32 %v765, %v768
    %vm770 = vweird.f32 %v764
    %vm771 = vweird.f32 %v765
    %vm772 = vmor %vm770, %vm771
    %v773 = vsel %vm772, %v765, %v769
    %v774 = vand.u32 2147483647, %v764
    %vm775 = vcmp.eq.f32.partialorder %v774, 8.507059e+37
    %v776 = vand.u32 %v764, 2147483648
    %v777 = vor.u32 1.1754944e-38, %v776
    %v778 = vsel %vm775, %v777, %v773
    %v779 = vmul.f32 1.0, %v778
    %v780 = vtanh.pop %v758
    %v781 = vmul.f32 %v779, %v655
    %783 = vrot.lane.b32.xlu0 %v780, 64
    %v784 = vpop.permute.xlu0 %783
    %v786 = vmul.f32 %v779, %v784
    %788 = vrot.lane.b32.xlu0 %v786, 32
    %v789 = vpop.permute.xlu0 %788
    %v791 = vadd.f32 %v781, %v789
    %v792 = vtanh.pop %v791
    %794 = vrot.lane.b32.xlu0 %v792, 64
    %v795 = vpop.permute.xlu0 %794
    %v797 = vmul.f32 %v779, %v795
    %799 = vrot.lane.b32.xlu0 %v797, 32
    %v800 = vpop.permute.xlu0 %799
    %802 = vrot.lane.b32.xlu0 %v723, 64
    %v803 = vpop.permute.xlu0 %802
    %v805 = vsel %vm140, %v800, %v803
    %v806 = vpack.c.bf16 %v805, %v805
    %v808 = vsel %vm167, %v806, 0
    %810 = vmatpush.bf16.msra.mxu0 0
    %811 = vmatpush.bf16.msra.mxu0 0
    %812 = vmatpush.bf16.msra.mxu0 0
    %813 = vmatpush.bf16.msra.mxu0 0
    %814 = vmatpush.bf16.msra.mxu0 %v254
    %815 = vmatpush.bf16.msra.mxu0 %v253
    %816 = vmatpush.bf16.msra.mxu0 %v252
    %817 = vmatpush.bf16.msra.mxu0 %v251
    %818 = vmatmul.bf16.gmra.mxu0 %v808
    %v819 = vpop.f32.mrf.mxu0
    %v820 = vadd.f32 %v119, %v819
    %v821 = vpop.f32.mrf.mxu0
    %822 = vdwg.mxu0
    %v823 = vxor.u32 %v820, 2147483648
    %v824 = vmul.f32 %v823, 1.442695
    %v825 = vpow.pop %v824
    %v826 = vadd.f32 %v825, 1.0
    %v827 = vrcp.pop %v826
    %v828 = vmul.f32 %v826, %v827
    %v829 = vsub.f32 1.0, %v828
    %v830 = vmul.f32 %v827, %v829
    %v831 = vadd.f32 %v827, %v830
    %vm832 = vweird.f32 %v826
    %vm833 = vweird.f32 %v827
    %vm834 = vmor %vm832, %vm833
    %v835 = vsel %vm834, %v827, %v831
    %v836 = vand.u32 2147483647, %v826
    %vm837 = vcmp.eq.f32.partialorder %v836, 8.507059e+37
    %v838 = vand.u32 %v826, 2147483648
    %v839 = vor.u32 1.1754944e-38, %v838
    %v840 = vsel %vm837, %v839, %v835
    %v841 = vmul.f32 1.0, %v840
    %v842 = vtanh.pop %v820
    %v843 = vmul.f32 %v841, %v717
    %845 = vrot.lane.b32.xlu0 %v842, 64
    %v846 = vpop.permute.xlu0 %845
    %v848 = vmul.f32 %v841, %v846
    %850 = vrot.lane.b32.xlu0 %v848, 32
    %v851 = vpop.permute.xlu0 %850
    %v853 = vadd.f32 %v843, %v851
    %v854 = vtanh.pop %v853
    %856 = vrot.lane.b32.xlu0 %v854, 64
    %v857 = vpop.permute.xlu0 %856
    %v859 = vmul.f32 %v841, %v857
    %861 = vrot.lane.b32.xlu0 %v859, 32
    %v862 = vpop.permute.xlu0 %861
    %s864 = scalar_lea.vmem [#allocation10], 8
    %865 = vst.msk [vmem:[%s864] sm:$0x3] %vm320, %v862
    %s866 = sld [smem:[#allocation3 + $0x280]]
    %s867 = scalar_lea.vmem [#allocation4], %s866
    %v868 = vld [vmem:[%s867] sm:$0x1]
    %s869 = sld [smem:[#allocation3 + $0x281]]
    %s870 = scalar_lea.vmem [#allocation4], %s869
    %v871 = vld [vmem:[%s870] sm:$0x1]
    %v873 = vperm.slane %v871, 0
    %v875 = vsel %vm134, %v868, %v873
    %876 = vrot.lane.b32.xlu0 %v797, 64
    %v877 = vpop.permute.xlu0 %876
    %v879 = vsel %vm140, %v875, %v877
    %v880 = vpack.c.bf16 %v879, %v879
    %v882 = vsel %vm167, %v880, 0
    %884 = vmatpush.bf16.msra.mxu0 0
    %885 = vmatpush.bf16.msra.mxu0 0
    %886 = vmatpush.bf16.msra.mxu0 0
    %887 = vmatpush.bf16.msra.mxu0 0
    %888 = vmatpush.bf16.msra.mxu0 %v162
    %889 = vmatpush.bf16.msra.mxu0 %v161
    %890 = vmatpush.bf16.msra.mxu0 %v160
    %891 = vmatpush.bf16.msra.mxu0 %v159
    %892 = vmatmul.bf16.gmra.mxu0 %v882
    %v893 = vpop.f32.mrf.mxu0
    %v894 = vadd.f32 %v115, %v893
    %v895 = vpop.f32.mrf.mxu0
    %896 = vdwg.mxu0
    %v897 = vxor.u32 %v894, 2147483648
    %v898 = vmul.f32 %v897, 1.442695
    %v899 = vpow.pop %v898
    %v900 = vadd.f32 %v899, 1.0
    %v901 = vrcp.pop %v900
    %v902 = vmul.f32 %v900, %v901
    %v903 = vsub.f32 1.0, %v902
    %v904 = vmul.f32 %v901, %v903
    %v905 = vadd.f32 %v901, %v904
    %vm906 = vweird.f32 %v900
    %vm907 = vweird.f32 %v901
    %vm908 = vmor %vm906, %vm907
    %v909 = vsel %vm908, %v901, %v905
    %v910 = vand.u32 2147483647, %v900
    %vm911 = vcmp.eq.f32.partialorder %v910, 8.507059e+37
    %v912 = vand.u32 %v900, 2147483648
    %v913 = vor.u32 1.1754944e-38, %v912
    %v914 = vsel %vm911, %v913, %v909
    %v915 = vmul.f32 1.0, %v914
    %v916 = vtanh.pop %v894
    %v917 = vmul.f32 %v915, %v791
    %919 = vrot.lane.b32.xlu0 %v916, 64
    %v920 = vpop.permute.xlu0 %919
    %v922 = vmul.f32 %v915, %v920
    %924 = vrot.lane.b32.xlu0 %v922, 32
    %v925 = vpop.permute.xlu0 %924
    %v927 = vadd.f32 %v917, %v925
    %v928 = vtanh.pop %v927
    %930 = vrot.lane.b32.xlu0 %v928, 64
    %v931 = vpop.permute.xlu0 %930
    %v933 = vmul.f32 %v915, %v931
    %935 = vrot.lane.b32.xlu0 %v933, 32
    %v936 = vpop.permute.xlu0 %935
    %938 = vrot.lane.b32.xlu0 %v859, 64
    %v939 = vpop.permute.xlu0 %938
    %v941 = vsel %vm140, %v936, %v939
    %v942 = vpack.c.bf16 %v941, %v941
    %v944 = vsel %vm167, %v942, 0
    %946 = vmatpush.bf16.msra.mxu0 0
    %947 = vmatpush.bf16.msra.mxu0 0
    %948 = vmatpush.bf16.msra.mxu0 0
    %949 = vmatpush.bf16.msra.mxu0 0
    %950 = vmatpush.bf16.msra.mxu0 %v254
    %951 = vmatpush.bf16.msra.mxu0 %v253
    %952 = vmatpush.bf16.msra.mxu0 %v252
    %953 = vmatpush.bf16.msra.mxu0 %v251
    %954 = vmatmul.bf16.gmra.mxu0 %v944
    %v955 = vpop.f32.mrf.mxu0
    %v956 = vadd.f32 %v119, %v955
    %v957 = vpop.f32.mrf.mxu0
    %958 = vdwg.mxu0
    %v959 = vxor.u32 %v956, 2147483648
    %v960 = vmul.f32 %v959, 1.442695
    %v961 = vpow.pop %v960
    %v962 = vadd.f32 %v961, 1.0
    %v963 = vrcp.pop %v962
    %v964 = vmul.f32 %v962, %v963
    %v965 = vsub.f32 1.0, %v964
    %v966 = vmul.f32 %v963, %v965
    %v967 = vadd.f32 %v963, %v966
    %vm968 = vweird.f32 %v962
    %vm969 = vweird.f32 %v963
    %vm970 = vmor %vm968, %vm969
    %v971 = vsel %vm970, %v963, %v967
    %v972 = vand.u32 2147483647, %v962
    %vm973 = vcmp.eq.f32.partialorder %v972, 8.507059e+37
    %v974 = vand.u32 %v962, 2147483648
    %v975 = vor.u32 1.1754944e-38, %v974
    %v976 = vsel %vm973, %v975, %v971
    %v977 = vmul.f32 1.0, %v976
    %v978 = vtanh.pop %v956
    %v979 = vmul.f32 %v977, %v853
    %981 = vrot.lane.b32.xlu0 %v978, 64
    %v982 = vpop.permute.xlu0 %981
    %v984 = vmul.f32 %v977, %v982
    %986 = vrot.lane.b32.xlu0 %v984, 32
    %v987 = vpop.permute.xlu0 %986
    %v989 = vadd.f32 %v979, %v987
    %v990 = vtanh.pop %v989
    %992 = vrot.lane.b32.xlu0 %v990, 64
    %v993 = vpop.permute.xlu0 %992
    %v995 = vmul.f32 %v977, %v993
    %997 = vrot.lane.b32.xlu0 %v995, 32
    %v998 = vpop.permute.xlu0 %997
    %s1000 = scalar_lea.vmem [#allocation10], 10
    %1001 = vst.msk [vmem:[%s1000] sm:$0x3] %vm320, %v998
    %s1002 = sld [smem:[#allocation3 + $0x300]]
    %s1003 = scalar_lea.vmem [#allocation4], %s1002
    %v1004 = vld [vmem:[%s1003] sm:$0x1]
    %s1005 = sld [smem:[#allocation3 + $0x301]]
    %s1006 = scalar_lea.vmem [#allocation4], %s1005
    %v1007 = vld [vmem:[%s1006] sm:$0x1]
    %v1009 = vperm.slane %v1007, 0
    %v1011 = vsel %vm134, %v1004, %v1009
    %1012 = vrot.lane.b32.xlu0 %v933, 64
    %v1013 = vpop.permute.xlu0 %1012
    %v1015 = vsel %vm140, %v1011, %v1013
    %v1016 = vpack.c.bf16 %v1015, %v1015
    %v1018 = vsel %vm167, %v1016, 0
    %1020 = vmatpush.bf16.msra.mxu0 0
    %1021 = vmatpush.bf16.msra.mxu0 0
    %1022 = vmatpush.bf16.msra.mxu0 0
    %1023 = vmatpush.bf16.msra.mxu0 0
    %1024 = vmatpush.bf16.msra.mxu0 %v162
    %1025 = vmatpush.bf16.msra.mxu0 %v161
    %1026 = vmatpush.bf16.msra.mxu0 %v160
    %1027 = vmatpush.bf16.msra.mxu0 %v159
    %1028 = vmatmul.bf16.gmra.mxu0 %v1018
    %v1029 = vpop.f32.mrf.mxu0
    %v1030 = vadd.f32 %v115, %v1029
    %v1031 = vpop.f32.mrf.mxu0
    %1032 = vdwg.mxu0
    %v1033 = vxor.u32 %v1030, 2147483648
    %v1034 = vmul.f32 %v1033, 1.442695
    %v1035 = vpow.pop %v1034
    %v1036 = vadd.f32 %v1035, 1.0
    %v1037 = vrcp.pop %v1036
    %v1038 = vmul.f32 %v1036, %v1037
    %v1039 = vsub.f32 1.0, %v1038
    %v1040 = vmul.f32 %v1037, %v1039
    %v1041 = vadd.f32 %v1037, %v1040
    %vm1042 = vweird.f32 %v1036
    %vm1043 = vweird.f32 %v1037
    %vm1044 = vmor %vm1042, %vm1043
    %v1045 = vsel %vm1044, %v1037, %v1041
    %v1046 = vand.u32 2147483647, %v1036
    %vm1047 = vcmp.eq.f32.partialorder %v1046, 8.507059e+37
    %v1048 = vand.u32 %v1036, 2147483648
    %v1049 = vor.u32 1.1754944e-38, %v1048
    %v1050 = vsel %vm1047, %v1049, %v1045
    %v1051 = vmul.f32 1.0, %v1050
    %v1052 = vtanh.pop %v1030
    %v1053 = vmul.f32 %v1051, %v927
    %1055 = vrot.lane.b32.xlu0 %v1052, 64
    %v1056 = vpop.permute.xlu0 %1055
    %v1058 = vmul.f32 %v1051, %v1056
    %1060 = vrot.lane.b32.xlu0 %v1058, 32
    %v1061 = vpop.permute.xlu0 %1060
    %v1063 = vadd.f32 %v1053, %v1061
    %v1064 = vtanh.pop %v1063
    %1066 = vrot.lane.b32.xlu0 %v1064, 64
    %v1067 = vpop.permute.xlu0 %1066
    %v1069 = vmul.f32 %v1051, %v1067
    %1071 = vrot.lane.b32.xlu0 %v1069, 32
    %v1072 = vpop.permute.xlu0 %1071
    %1074 = vrot.lane.b32.xlu0 %v995, 64
    %v1075 = vpop.permute.xlu0 %1074
    %v1077 = vsel %vm140, %v1072, %v1075
    %v1078 = vpack.c.bf16 %v1077, %v1077
    %v1080 = vsel %vm167, %v1078, 0
    %1082 = vmatpush.bf16.msra.mxu0 0
    %1083 = vmatpush.bf16.msra.mxu0 0
    %1084 = vmatpush.bf16.msra.mxu0 0
    %1085 = vmatpush.bf16.msra.mxu0 0
    %1086 = vmatpush.bf16.msra.mxu0 %v254
    %1087 = vmatpush.bf16.msra.mxu0 %v253
    %1088 = vmatpush.bf16.msra.mxu0 %v252
    %1089 = vmatpush.bf16.msra.mxu0 %v251
    %1090 = vmatmul.bf16.gmra.mxu0 %v1080
    %v1091 = vpop.f32.mrf.mxu0
    %v1092 = vadd.f32 %v119, %v1091
    %v1093 = vpop.f32.mrf.mxu0
    %1094 = vdwg.mxu0
    %v1095 = vxor.u32 %v1092, 2147483648
    %v1096 = vmul.f32 %v1095, 1.442695
    %v1097 = vpow.pop %v1096
    %v1098 = vadd.f32 %v1097, 1.0
    %v1099 = vrcp.pop %v1098
    %v1100 = vmul.f32 %v1098, %v1099
    %v1101 = vsub.f32 1.0, %v1100
    %v1102 = vmul.f32 %v1099, %v1101
    %v1103 = vadd.f32 %v1099, %v1102
    %vm1104 = vweird.f32 %v1098
    %vm1105 = vweird.f32 %v1099
    %vm1106 = vmor %vm1104, %vm1105
    %v1107 = vsel %vm1106, %v1099, %v1103
    %v1108 = vand.u32 2147483647, %v1098
    %vm1109 = vcmp.eq.f32.partialorder %v1108, 8.507059e+37
    %v1110 = vand.u32 %v1098, 2147483648
    %v1111 = vor.u32 1.1754944e-38, %v1110
    %v1112 = vsel %vm1109, %v1111, %v1107
    %v1113 = vmul.f32 1.0, %v1112
    %v1114 = vtanh.pop %v1092
    %v1115 = vmul.f32 %v1113, %v989
    %1117 = vrot.lane.b32.xlu0 %v1114, 64
    %v1118 = vpop.permute.xlu0 %1117
    %v1120 = vmul.f32 %v1113, %v1118
    %1122 = vrot.lane.b32.xlu0 %v1120, 32
    %v1123 = vpop.permute.xlu0 %1122
    %v1125 = vadd.f32 %v1115, %v1123
    %v1126 = vtanh.pop %v1125
    %1128 = vrot.lane.b32.xlu0 %v1126, 64
    %v1129 = vpop.permute.xlu0 %1128
    %v1131 = vmul.f32 %v1113, %v1129
    %1133 = vrot.lane.b32.xlu0 %v1131, 32
    %v1134 = vpop.permute.xlu0 %1133
    %s1136 = scalar_lea.vmem [#allocation10], 12
    %1137 = vst.msk [vmem:[%s1136] sm:$0x3] %vm320, %v1134
    %s1138 = sld [smem:[#allocation3 + $0x380]]
    %s1139 = scalar_lea.vmem [#allocation4], %s1138
    %v1140 = vld [vmem:[%s1139] sm:$0x1]
    %s1141 = sld [smem:[#allocation3 + $0x381]]
    %s1142 = scalar_lea.vmem [#allocation4], %s1141
    %v1143 = vld [vmem:[%s1142] sm:$0x1]
    %v1145 = vperm.slane %v1143, 0
    %v1147 = vsel %vm134, %v1140, %v1145
    %1148 = vrot.lane.b32.xlu0 %v1069, 64
    %v1149 = vpop.permute.xlu0 %1148
    %v1151 = vsel %vm140, %v1147, %v1149
    %v1152 = vpack.c.bf16 %v1151, %v1151
    %v1154 = vsel %vm167, %v1152, 0
    %1156 = vmatpush.bf16.msra.mxu0 0
    %1157 = vmatpush.bf16.msra.mxu0 0
    %1158 = vmatpush.bf16.msra.mxu0 0
    %1159 = vmatpush.bf16.msra.mxu0 0
    %1160 = vmatpush.bf16.msra.mxu0 %v162
    %1161 = vmatpush.bf16.msra.mxu0 %v161
    %1162 = vmatpush.bf16.msra.mxu0 %v160
    %1163 = vmatpush.bf16.msra.mxu0 %v159
    %1164 = vmatmul.bf16.gmra.mxu0 %v1154
    %v1165 = vpop.f32.mrf.mxu0
    %v1166 = vadd.f32 %v115, %v1165
    %v1167 = vpop.f32.mrf.mxu0
    %1168 = vdwg.mxu0
    %v1169 = vxor.u32 %v1166, 2147483648
    %v1170 = vmul.f32 %v1169, 1.442695
    %v1171 = vpow.pop %v1170
    %v1172 = vadd.f32 %v1171, 1.0
    %v1173 = vrcp.pop %v1172
    %v1174 = vmul.f32 %v1172, %v1173
    %v1175 = vsub.f32 1.0, %v1174
    %v1176 = vmul.f32 %v1173, %v1175
    %v1177 = vadd.f32 %v1173, %v1176
    %vm1178 = vweird.f32 %v1172
    %vm1179 = vweird.f32 %v1173
    %vm1180 = vmor %vm1178, %vm1179
    %v1181 = vsel %vm1180, %v1173, %v1177
    %v1182 = vand.u32 2147483647, %v1172
    %vm1183 = vcmp.eq.f32.partialorder %v1182, 8.507059e+37
    %v1184 = vand.u32 %v1172, 2147483648
    %v1185 = vor.u32 1.1754944e-38, %v1184
    %v1186 = vsel %vm1183, %v1185, %v1181
    %v1187 = vmul.f32 1.0, %v1186
    %v1188 = vtanh.pop %v1166
    %v1189 = vmul.f32 %v1187, %v1063
    %1191 = vrot.lane.b32.xlu0 %v1188, 64
    %v1192 = vpop.permute.xlu0 %1191
    %v1194 = vmul.f32 %v1187, %v1192
    %1196 = vrot.lane.b32.xlu0 %v1194, 32
    %v1197 = vpop.permute.xlu0 %1196
    %v1199 = vadd.f32 %v1189, %v1197
    %v1200 = vtanh.pop %v1199
    %1202 = vrot.lane.b32.xlu0 %v1200, 64
    %v1203 = vpop.permute.xlu0 %1202
    %v1205 = vmul.f32 %v1187, %v1203
    %1207 = vrot.lane.b32.xlu0 %v1205, 32
    %v1208 = vpop.permute.xlu0 %1207
    %1210 = vrot.lane.b32.xlu0 %v1131, 64
    %v1211 = vpop.permute.xlu0 %1210
    %v1213 = vsel %vm140, %v1208, %v1211
    %v1214 = vpack.c.bf16 %v1213, %v1213
    %v1216 = vsel %vm167, %v1214, 0
    %1218 = vmatpush.bf16.msra.mxu0 0
    %1219 = vmatpush.bf16.msra.mxu0 0
    %1220 = vmatpush.bf16.msra.mxu0 0
    %1221 = vmatpush.bf16.msra.mxu0 0
    %1222 = vmatpush.bf16.msra.mxu0 %v254
    %1223 = vmatpush.bf16.msra.mxu0 %v253
    %1224 = vmatpush.bf16.msra.mxu0 %v252
    %1225 = vmatpush.bf16.msra.mxu0 %v251
    %1226 = vmatmul.bf16.gmra.mxu0 %v1216
    %v1227 = vpop.f32.mrf.mxu0
    %v1228 = vadd.f32 %v119, %v1227
    %v1229 = vpop.f32.mrf.mxu0
    %1230 = vdwg.mxu0
    %v1231 = vxor.u32 %v1228, 2147483648
    %v1232 = vmul.f32 %v1231, 1.442695
    %v1233 = vpow.pop %v1232
    %v1234 = vadd.f32 %v1233, 1.0
    %v1235 = vrcp.pop %v1234
    %v1236 = vmul.f32 %v1234, %v1235
    %v1237 = vsub.f32 1.0, %v1236
    %v1238 = vmul.f32 %v1235, %v1237
    %v1239 = vadd.f32 %v1235, %v1238
    %vm1240 = vweird.f32 %v1234
    %vm1241 = vweird.f32 %v1235
    %vm1242 = vmor %vm1240, %vm1241
    %v1243 = vsel %vm1242, %v1235, %v1239
    %v1244 = vand.u32 2147483647, %v1234
    %vm1245 = vcmp.eq.f32.partialorder %v1244, 8.507059e+37
    %v1246 = vand.u32 %v1234, 2147483648
    %v1247 = vor.u32 1.1754944e-38, %v1246
    %v1248 = vsel %vm1245, %v1247, %v1243
    %v1249 = vmul.f32 1.0, %v1248
    %v1250 = vtanh.pop %v1228
    %v1251 = vmul.f32 %v1249, %v1125
    %1253 = vrot.lane.b32.xlu0 %v1250, 64
    %v1254 = vpop.permute.xlu0 %1253
    %v1256 = vmul.f32 %v1249, %v1254
    %1258 = vrot.lane.b32.xlu0 %v1256, 32
    %v1259 = vpop.permute.xlu0 %1258
    %v1261 = vadd.f32 %v1251, %v1259
    %v1262 = vtanh.pop %v1261
    %1264 = vrot.lane.b32.xlu0 %v1262, 64
    %v1265 = vpop.permute.xlu0 %1264
    %v1267 = vmul.f32 %v1249, %v1265
    %1269 = vrot.lane.b32.xlu0 %v1267, 32
    %v1270 = vpop.permute.xlu0 %1269
    %s1272 = scalar_lea.vmem [#allocation10], 14
    %1273 = vst.msk [vmem:[%s1272] sm:$0x3] %vm320, %v1270
    %1274 = vst.msk [vmem:[#allocation11] sm:$0x3] %vm320, %v1208
    %1276 = vrot.lane.b32.xlu0 %v1199, 96
    %v1277 = vpop.permute.xlu0 %1276
    %1279 = vst.msk [vmem:[#allocation13] sm:$0x3] %vm320, %v1277
    %1280 = vst.msk [vmem:[#allocation14] sm:$0x3] %vm320, %v1270
    %1282 = vrot.lane.b32.xlu0 %v1261, 96
    %v1283 = vpop.permute.xlu0 %1282
    %1285 = vst.msk [vmem:[#allocation16] sm:$0x3] %vm320, %v1283
    // Predicated region
    $region50: #{tpu_custom_call.1} parent=1 // pred_check
      _
    $region51: #{tpu_custom_call.1} parent=1 // pred_check_branch
      %1287 = sbr.rel (0) target = $region53
    $region52: #{tpu_custom_call.1} parent=1 // pred_region
      %1289 = vsyncadd [#allocation6], 0
      %s1290 = sshll.u32 [#allocation10], 4
      %s1291 = int_to_ptr.vmem [resolvable:$true] %s1290
      %s1292 = sshll.u32 %s10, 4
      %s1293 = int_to_ptr.hbm [resolvable:$true] %s1292
      %1298 = dma.vmem_to_hbm [thread:$0]  %s1291, 256, %s1293, [#allocation6], 32, 32, 2
    $region53: #{tpu_custom_call.1} parent=1 // pred_fallthru
      _
    // Predicated region
    $region54: #{tpu_custom_call.1} parent=1 // pred_check
      _
    $region55: #{tpu_custom_call.1} parent=1 // pred_check_branch
      %1300 = sbr.rel (0) target = $region57
    $region56: #{tpu_custom_call.1} parent=1 // pred_region
      %1302 = vsyncadd [#allocation12], 0
      %s1304 = sshll.u32 [#allocation11], 4
      %s1305 = int_to_ptr.vmem [resolvable:$true] %s1304
      %s1306 = sshll.u32 %s11, 4
      %s1307 = int_to_ptr.hbm [resolvable:$true] %s1306
      %1309 = dma.vmem_to_hbm [thread:$0]  %s1305, 32, %s1307, [#allocation12]
    $region57: #{tpu_custom_call.1} parent=1 // pred_fallthru
      _
    // Predicated region
    $region58: #{tpu_custom_call.1} parent=1 // pred_check
      _
    $region59: #{tpu_custom_call.1} parent=1 // pred_check_branch
      %1311 = sbr.rel (0) target = $region61
    $region60: #{tpu_custom_call.1} parent=1 // pred_region
      %1313 = vsyncadd [#allocation12], 0
      %s1315 = sshll.u32 [#allocation13], 4
      %s1316 = int_to_ptr.vmem [resolvable:$true] %s1315
      %s1317 = sshll.u32 %s12, 4
      %s1318 = int_to_ptr.hbm [resolvable:$true] %s1317
      %1320 = dma.vmem_to_hbm [thread:$0]  %s1316, 32, %s1318, [#allocation12]
    $region61: #{tpu_custom_call.1} parent=1 // pred_fallthru
      _
    // Predicated region
    $region62: #{tpu_custom_call.1} parent=1 // pred_check
      _
    $region63: #{tpu_custom_call.1} parent=1 // pred_check_branch
      %1322 = sbr.rel (0) target = $region65
    $region64: #{tpu_custom_call.1} parent=1 // pred_region
      %1324 = vsyncadd [#allocation15], 0
      %s1326 = sshll.u32 [#allocation14], 4
      %s1327 = int_to_ptr.vmem [resolvable:$true] %s1326
      %s1328 = sshll.u32 %s13, 4
      %s1329 = int_to_ptr.hbm [resolvable:$true] %s1328
      %1331 = dma.vmem_to_hbm [thread:$0]  %s1327, 32, %s1329, [#allocation15]
    $region65: #{tpu_custom_call.1} parent=1 // pred_fallthru
      _
    // Predicated region
    $region66: #{tpu_custom_call.1} parent=1 // pred_check
      _
    $region67: #{tpu_custom_call.1} parent=1 // pred_check_branch
      %1333 = sbr.rel (0) target = $region69
    $region68: #{tpu_custom_call.1} parent=1 // pred_region
      %1335 = vsyncadd [#allocation15], 0
      %s1337 = sshll.u32 [#allocation16], 4
      %s1338 = int_to_ptr.vmem [resolvable:$true] %s1337
      %s1339 = sshll.u32 %s14, 4
      %s1340 = int_to_ptr.hbm [resolvable:$true] %s1339
      %1342 = dma.vmem_to_hbm [thread:$0]  %s1338, 32, %s1340, [#allocation15]
    $region69: #{tpu_custom_call.1} parent=1 // pred_fallthru
      _
    // Predicated region
    $region70: #{tpu_custom_call.1} parent=1 // pred_check
      _
    $region71: #{tpu_custom_call.1} parent=1 // pred_check_branch
      %1344 = sbr.rel (0) target = $region73
    $region72: #{tpu_custom_call.1} parent=1 // pred_region
      %1346 = dma.done [#allocation6], 256
    $region73: #{tpu_custom_call.1} parent=1 // pred_fallthru
      _
    // Predicated region
    $region74: #{tpu_custom_call.1} parent=1 // pred_check
      _
    $region75: #{tpu_custom_call.1} parent=1 // pred_check_branch
      %1348 = sbr.rel (0) target = $region77
    $region76: #{tpu_custom_call.1} parent=1 // pred_region
      %1350 = dma.done [#allocation12], 32
    $region77: #{tpu_custom_call.1} parent=1 // pred_fallthru
      _
    // Predicated region
    $region78: #{tpu_custom_call.1} parent=1 // pred_check
      _
    $region79: #{tpu_custom_call.1} parent=1 // pred_check_branch
      %1352 = sbr.rel (0) target = $region81
    $region80: #{tpu_custom_call.1} parent=1 // pred_region
      %1354 = dma.done [#allocation12], 32
    $region81: #{tpu_custom_call.1} parent=1 // pred_fallthru
      _
    // Predicated region
    $region82: #{tpu_custom_call.1} parent=1 // pred_check
      _
    $region83: #{tpu_custom_call.1} parent=1 // pred_check_branch
      %1356 = sbr.rel (0) target = $region85
    $region84: #{tpu_custom_call.1} parent=1 // pred_region
      %1358 = dma.done [#allocation15], 32
    $region85: #{tpu_custom_call.1} parent=1 // pred_fallthru
      _
    // Predicated region
    $region86: #{tpu_custom_call.1} parent=1 // pred_check
      _
    $region87: #{tpu_custom_call.1} parent=1 // pred_check_branch
      %1360 = sbr.rel (0) target = $region89
    $region88: #{tpu_custom_call.1} parent=1 // pred_region
      %1362 = dma.done [#allocation15], 32
    $region89: #{tpu_custom_call.1} parent=1 // pred_fallthru
      _
    %1363 = vsyncpa [#allocation5], 1
    %1364 = vsyncpa [#allocation8], 1
    %1365 = vsyncpa [#allocation6], 1
    %1366 = vsyncpa [#allocation12], 1
    %1367 = vsyncpa [#allocation15], 1

</llo_original>
